<compile_context>
chip_gen: v6e
topology: v6e:2x2x1
jax: 0.10.0
libtpu: 0.0.40
codegen_flags: <defaults>
</compile_context>

<pallas_src>
import numpy as np
import jax
import jax.numpy as jnp
from jax.experimental import pallas as pl
from jax.experimental.pallas import tpu as pltpu

BN_EPS = 1e-5


def _round_up(x, m):
    return ((x + m - 1) // m) * m


def _vmem_limit_bytes():
    """~80% of physical VMEM, capped at 100 MiB (v5e/v6e: ~100 MiB, v7x: ~51 MiB)."""
    cap = 64 * 1024 * 1024
    try:
        info = pltpu.get_tpu_info()
        cap = int(getattr(info, "vmem_capacity_bytes", cap))
    except Exception:
        pass
    return min(int(cap * 0.8), 100 * 1024 * 1024)


# ---------------------------------------------------------------------------
# Pallas kernel 1: pairwise squared distance -> per-radius in-radius masks.
# One (batch, N-tile) per grid step.  VPU-only cross term (3 broadcast FMAs),
# distances kept in f32 in VMEM, only 1-byte masks go back to HBM.
# ---------------------------------------------------------------------------
def _make_mask_kernel(radii_sq):
    def kernel(src_ref, dstT_ref, *out_refs):
        # src_ref block: [1, S, 3] ; dstT_ref block: [1, 3, TN] ; outs: [1, S, TN] int8
        src = src_ref[0].astype(jnp.float32)        # [S, 3]
        dstT = dstT_ref[0].astype(jnp.float32)      # [3, TN]
        cross = (src[:, 0:1] * dstT[0:1, :]
                 + src[:, 1:2] * dstT[1:2, :]
                 + src[:, 2:3] * dstT[2:3, :])      # [S, TN]
        src_sq = jnp.sum(src * src, axis=1, keepdims=True)     # [S, 1]
        dst_sq = jnp.sum(dstT * dstT, axis=0, keepdims=True)   # [1, TN]
        d = src_sq + dst_sq - 2.0 * cross                      # f32 distances
        for r2, oref in zip(radii_sq, out_refs):
            oref[0] = (d <= r2).astype(jnp.int8)    # radius test in f32, store 1 byte
    return kernel


def pairwise_ball_masks(new_xyz, xyz_bcn, radius_list, tn=1024):
    """new_xyz: [B, S, 3], xyz_bcn: [B, 3, N] -> tuple of [B, S, Np] int8 masks."""
    B, S, C = new_xyz.shape
    N = xyz_bcn.shape[2]
    if N <= tn:
        TN, Np = N, N
        dstT = xyz_bcn
    else:
        TN = tn                                    # multiple of 128
        Np = _round_up(N, TN)
        dstT = xyz_bcn
        if Np != N:
            # Pad with far-away coordinates so padded points never fall in-radius.
            dstT = jnp.pad(dstT, ((0, 0), (0, 0), (0, Np - N)), constant_values=1e6)

    radii_sq = [float(r) ** 2 for r in radius_list]
    out_shape = tuple(jax.ShapeDtypeStruct((B, S, Np), jnp.int8) for _ in radii_sq)
    out_specs = [pl.BlockSpec((1, S, TN), lambda b, n: (b, 0, n)) for _ in radii_sq]
    masks = pl.pallas_call(
        _make_mask_kernel(radii_sq),
        out_shape=out_shape,
        grid=(B, Np // TN),
        in_specs=[pl.BlockSpec((1, S, C), lambda b, n: (b, 0, 0)),
                  pl.BlockSpec((1, C, TN), lambda b, n: (b, 0, n))],
        out_specs=out_specs,
        compiler_params=pltpu.CompilerParams(
            dimension_semantics=("parallel", "parallel"),
            vmem_limit_bytes=_vmem_limit_bytes()),
    )(new_xyz, dstT)
    return masks


# ---------------------------------------------------------------------------
# Pallas kernel 2: fused (1x1 conv + folded BN bias -> ReLU)* stack + max over
# nsample, TS centroids per grid step, bf16 MXU inputs, channels-first output.
# ---------------------------------------------------------------------------
def _make_mlp_max_kernel(num_layers, ts, k):
    def kernel(*refs):
        x_ref = refs[0]            # block [1, TS*K, C0] bf16
        out_ref = refs[-1]         # block [1, C_last, TS] f32
        p = refs[1:-1]             # per layer: w [Cin, Cout] bf16, shift [1, Cout] f32
        h = x_ref[0]               # [TS*K, C0] bf16
        for j in range(num_layers):
            w = p[2 * j][...]
            sh = p[2 * j + 1][...]
            h = jnp.dot(h, w, preferred_element_type=jnp.float32)   # MXU, bf16 in / f32 acc
            h = jnp.maximum(h + sh, 0.0)                            # folded bias+BN, ReLU
            if j + 1 < num_layers:
                h = h.astype(jnp.bfloat16)                          # keep MXU fed bf16
        c_last = h.shape[-1]
        hm = jnp.max(h.reshape(ts, k, c_last), axis=1)              # [TS, C_last] max over K
        out_ref[0] = jnp.transpose(hm)                              # [C_last, TS] lane-dense
    return kernel


def mlp_max_pallas(grouped, layer_params):
    """grouped: [B, S, K, C0] bf16 channels-last; layer_params: list of (w_bf16, shift_f32).

    Returns [B, C_last, S] float32 (channels-first, PyTorch layout).
    """
    B, S, K, C0 = grouped.shape
    num_layers = len(layer_params)
    C_last = layer_params[-1][0].shape[1]
    c_max = max(w.shape[1] for (w, _) in layer_params)
    vmem_limit = _vmem_limit_bytes()

    # Derive the S-tile from the VMEM budget (double-buffered bf16 input +
    # f32 activations), keep it a multiple of 128 for a lane-dense output store.
    per_row = K * (2 * 2 * C0 + 10 * c_max)      # bytes per centroid row (rough)
    budget = vmem_limit // 2
    ts_cap = max(128, min(1024, (budget // max(per_row, 1)) // 128 * 128))
    if S <= 128:
        TS, Sp = S, S                            # block == full dim (allowed), tiny case
    else:
        TS = min(ts_cap, _round_up(S, 128))
        Sp = _round_up(S, TS)

    x = grouped
    if Sp != S:
        x = jnp.pad(x, ((0, 0), (0, Sp - S), (0, 0), (0, 0)))
    x = x.reshape(B, Sp * K, C0)                 # sublane-dense flat slab

    in_specs = [pl.BlockSpec((1, TS * K, C0), lambda b, s: (b, s, 0))]
    flat_params = []
    for (w, sh) in layer_params:
        # Constant index_maps -> params stay VMEM-resident across grid steps.
        in_specs.append(pl.BlockSpec(w.shape, lambda b, s: (0, 0)))
        in_specs.append(pl.BlockSpec(sh.shape, lambda b, s: (0, 0)))
        flat_params += [w, sh]

    out = pl.pallas_call(
        _make_mlp_max_kernel(num_layers, TS, K),
        out_shape=jax.ShapeDtypeStruct((B, C_last, Sp), jnp.float32),
        grid=(B, Sp // TS),
        in_specs=in_specs,
        out_specs=pl.BlockSpec((1, C_last, TS), lambda b, s: (b, 0, s)),
        compiler_params=pltpu.CompilerParams(
            dimension_semantics=("parallel", "parallel"),
            vmem_limit_bytes=vmem_limit),
    )(x, *flat_params)
    return out[:, :, :S] if Sp != S else out


# ---------------------------------------------------------------------------
# Plain-JAX glue: FPS sampling, gathers, ball-query selection (data-dependent
# indexing kept outside the Pallas kernels).
# TODO(synk): the group gather (index_points) stays in XLA; fusing it into the
# MLP kernel via scalar-prefetched group_idx + manual DMA gather would remove
# the remaining [B,S,K,C] HBM round trip (it is already halved via bf16).
# ---------------------------------------------------------------------------
def farthest_point_sample(xyz, npoint):
    """xyz: [B, N, 3] -> centroids: [B, npoint] int32."""
    B, N, _ = xyz.shape
    distance = jnp.full((B, N), 1e10, dtype=jnp.float32)
    # TODO(synk): torch uses torch.randint for the initial farthest point; fixed to 0 here.
    farthest = jnp.zeros((B,), dtype=jnp.int32)
    centroids = jnp.zeros((B, npoint), dtype=jnp.int32)
    batch_idx = jnp.arange(B)

    def body(i, carry):
        centroids, distance, farthest = carry
        centroids = centroids.at[:, i].set(farthest)
        centroid = xyz[batch_idx, farthest][:, None, :]          # [B, 1, 3]
        dist = jnp.sum((xyz - centroid) ** 2, axis=-1)           # [B, N]
        distance = jnp.minimum(distance, dist)
        farthest = jnp.argmax(distance, axis=-1).astype(jnp.int32)
        return centroids, distance, farthest

    centroids, _, _ = jax.lax.fori_loop(0, npoint, body, (centroids, distance, farthest))
    return centroids


def index_points(points, idx):
    """points: [B, N, C], idx: [B, ...] int -> [B, ..., C]."""
    B = points.shape[0]
    C = points.shape[-1]
    idx_flat = idx.reshape(B, -1)
    out = jnp.take_along_axis(points, idx_flat[..., None], axis=1)
    return out.reshape(idx.shape + (C,))


def query_ball_group_idx(mask, nsample):
    """mask: [B, S, Np] int8 (1 = within radius) -> group_idx [B, S, nsample] int32.

    Equivalent to the PyTorch sort-based selection: first `nsample` in-radius
    indices in ascending order, padded with the first in-radius index.
    Uses lax.top_k (partial selection) instead of a full O(N log N) sort.
    """
    B, S, Np = mask.shape
    idx_n = jnp.broadcast_to(jnp.arange(Np, dtype=jnp.int32), (B, S, Np))
    masked_idx = jnp.where(mask > 0, idx_n, Np)                 # sentinel = Np
    neg_vals, _ = jax.lax.top_k(-masked_idx, nsample)           # nsample smallest indices
    group_idx = -neg_vals                                       # ascending
    group_first = group_idx[:, :, 0:1]
    group_idx = jnp.where(group_idx == Np, group_first, group_idx)
    return group_idx


# ---------------------------------------------------------------------------
# Parameter init (deterministic, synthetic) + conv-bias/BN folding (eval
# semantics): scale folded into weight columns, shift kept per-channel.
# ---------------------------------------------------------------------------
def init_folded_params(key, in_channel, mlp_list):
    """Returns list (per scale) of lists of (w_bf16 [Cin,Cout], shift_f32 [1,Cout])."""
    params = []
    for mlp in mlp_list:
        layer_params = []
        last = in_channel + 3
        for out_ch in mlp:
            key, k1, k2, k3, k4 = jax.random.split(key, 5)
            w = jax.random.normal(k1, (out_ch, last), jnp.float32) / np.sqrt(last)
            b = 0.01 * jax.random.normal(k2, (out_ch,), jnp.float32)
            gamma = 1.0 + 0.1 * jax.random.normal(k3, (out_ch,), jnp.float32)
            beta = 0.1 * jax.random.normal(k4, (out_ch,), jnp.float32)
            running_mean = jnp.zeros((out_ch,), jnp.float32)
            running_var = jnp.ones((out_ch,), jnp.float32)
            # BN(conv(x)) = scale * (x @ w^T + b - mean) + beta  =  x @ (w^T * scale) + shift
            scale = gamma / jnp.sqrt(running_var + BN_EPS)
            shift = beta + scale * (b - running_mean)
            w_folded = (w.T * scale[None, :]).astype(jnp.bfloat16)
            layer_params.append((w_folded, shift[None, :].astype(jnp.float32)))
            last = out_ch
        params.append(layer_params)
    return params


# ---------------------------------------------------------------------------
# Full forward pass (PointNetSetAbstractionMsg.forward).
# ---------------------------------------------------------------------------
def pointnet_sa_msg_forward(xyz_bcn, points_bdn, npoint, radius_list,
                            nsample_list, folded_params):
    xyz = jnp.transpose(xyz_bcn, (0, 2, 1))        # [B, N, 3]
    points = jnp.transpose(points_bdn, (0, 2, 1))  # [B, N, D]
    B, N, _ = xyz.shape
    S = npoint

    fps_idx = farthest_point_sample(xyz, S)        # [B, S]
    new_xyz = index_points(xyz, fps_idx)           # [B, S, 3]

    # Distances are radius-independent: computed once; only int8 masks hit HBM.
    masks = pairwise_ball_masks(new_xyz, xyz_bcn, radius_list)   # tuple of [B,S,Np] int8

    new_points_list = []
    for i, _radius in enumerate(radius_list):
        K = nsample_list[i]
        group_idx = query_ball_group_idx(masks[i], K)                        # [B, S, K]
        grouped_xyz = index_points(xyz, group_idx) - new_xyz[:, :, None, :]  # [B, S, K, 3]
        grouped_points = jnp.concatenate(
            [index_points(points, group_idx), grouped_xyz],
            axis=-1).astype(jnp.bfloat16)                                    # [B, S, K, D+3] bf16
        new_points = mlp_max_pallas(grouped_points, folded_params[i])        # [B, C_last, S]
        new_points_list.append(new_points)

    new_xyz_out = jnp.transpose(new_xyz, (0, 2, 1))                    # [B, 3, S]
    new_points_concat = jnp.concatenate(new_points_list, axis=1)       # [B, sum(C_last), S]
    return new_xyz_out, new_points_concat


if __name__ == "__main__":
    key = jax.random.PRNGKey(0)
    B, N, D = 2, 16, 4              # batch, points, feature channels
    npoint = 8
    radius_list = (0.4, 0.8)
    nsample_list = (4, 8)
    mlp_list = [[8, 16], [8, 32]]

    k_xyz, k_pts, k_par = jax.random.split(key, 3)
    xyz = jax.random.uniform(k_xyz, (B, 3, N), jnp.float32)      # [B, 3, N]
    points = jax.random.normal(k_pts, (B, D, N), jnp.float32)    # [B, D, N]

    params = init_folded_params(k_par, D, mlp_list)

    fwd = jax.jit(pointnet_sa_msg_forward, static_argnums=(2, 3, 4))
    new_xyz, new_points_concat = fwd(xyz, points, npoint, radius_list,
                                     nsample_list, params)
    jax.block_until_ready((new_xyz, new_points_concat))

    assert new_xyz.shape == (B, 3, npoint)
    assert new_points_concat.shape == (B, sum(m[-1] for m in mlp_list), npoint)
    assert bool(jnp.all(jnp.isfinite(new_points_concat)))
    print("KERNEL_OK")
</pallas_src>

<mosaic_0001>
module attributes {stable_mosaic.version = 11 : i64} {
  func.func @kernel(%arg0: i32, %arg1: i32, %arg2: memref<1x8x3xf32, #tpu.memory_space<vmem>>, %arg3: memref<1x3x16xf32, #tpu.memory_space<vmem>>, %arg4: memref<1x8x16xi8, #tpu.memory_space<vmem>>, %arg5: memref<1x8x16xi8, #tpu.memory_space<vmem>>) attributes {dimension_semantics = [#tpu.dimension_semantics<parallel>, #tpu.dimension_semantics<parallel>], iteration_bounds = array<i64: 2, 1>, scalar_prefetch = 0 : i64, scratch_operands = 0 : i64, tpu.core_type = #tpu.core_type<tc>, window_params = [{transform_indices = @transform_0, window_bounds = array<i64: 1, 8, 3>}, {transform_indices = @transform_1, window_bounds = array<i64: 1, 3, 16>}, {transform_indices = @transform_2, window_bounds = array<i64: 1, 8, 16>}, {transform_indices = @transform_3, window_bounds = array<i64: 1, 8, 16>}]} {
    %c0 = arith.constant 0 : index
    %c0_0 = arith.constant 0 : index
    %c0_1 = arith.constant 0 : index
    %0 = vector.load %arg2[%c0, %c0_0, %c0_1] : memref<1x8x3xf32, #tpu.memory_space<vmem>>, vector<1x8x3xf32>
    %1 = vector.shape_cast %0 : vector<1x8x3xf32> to vector<8x3xf32>
    %c0_2 = arith.constant 0 : index
    %c0_3 = arith.constant 0 : index
    %c0_4 = arith.constant 0 : index
    %2 = vector.load %arg3[%c0_2, %c0_3, %c0_4] : memref<1x3x16xf32, #tpu.memory_space<vmem>>, vector<1x3x16xf32>
    %3 = vector.shape_cast %2 : vector<1x3x16xf32> to vector<3x16xf32>
    %4 = vector.extract_strided_slice %1 {offsets = [0, 0], sizes = [8, 1], strides = [1, 1]} : vector<8x3xf32> to vector<8x1xf32>
    %5 = vector.extract_strided_slice %3 {offsets = [0, 0], sizes = [1, 16], strides = [1, 1]} : vector<3x16xf32> to vector<1x16xf32>
    %6 = vector.broadcast %4 : vector<8x1xf32> to vector<8x16xf32>
    %7 = vector.broadcast %5 : vector<1x16xf32> to vector<8x16xf32>
    %8 = arith.mulf %6, %7 : vector<8x16xf32>
    %9 = vector.extract_strided_slice %1 {offsets = [0, 1], sizes = [8, 1], strides = [1, 1]} : vector<8x3xf32> to vector<8x1xf32>
    %10 = vector.extract_strided_slice %3 {offsets = [1, 0], sizes = [1, 16], strides = [1, 1]} : vector<3x16xf32> to vector<1x16xf32>
    %11 = vector.broadcast %9 : vector<8x1xf32> to vector<8x16xf32>
    %12 = vector.broadcast %10 : vector<1x16xf32> to vector<8x16xf32>
    %13 = arith.mulf %11, %12 : vector<8x16xf32>
    %14 = arith.addf %8, %13 : vector<8x16xf32>
    %15 = vector.extract_strided_slice %1 {offsets = [0, 2], sizes = [8, 1], strides = [1, 1]} : vector<8x3xf32> to vector<8x1xf32>
    %16 = vector.extract_strided_slice %3 {offsets = [2, 0], sizes = [1, 16], strides = [1, 1]} : vector<3x16xf32> to vector<1x16xf32>
    %17 = vector.broadcast %15 : vector<8x1xf32> to vector<8x16xf32>
    %18 = vector.broadcast %16 : vector<1x16xf32> to vector<8x16xf32>
    %19 = arith.mulf %17, %18 : vector<8x16xf32>
    %20 = arith.addf %14, %19 : vector<8x16xf32>
    %21 = arith.mulf %1, %1 : vector<8x3xf32>
    %cst = arith.constant dense<0.000000e+00> : vector<8xf32>
    %22 = vector.multi_reduction <add>, %21, %cst [1] : vector<8x3xf32> to vector<8xf32>
    %23 = vector.shape_cast %22 : vector<8xf32> to vector<8x1xf32>
    %24 = arith.mulf %3, %3 : vector<3x16xf32>
    %cst_5 = arith.constant dense<0.000000e+00> : vector<16xf32>
    %25 = vector.multi_reduction <add>, %24, %cst_5 [0] : vector<3x16xf32> to vector<16xf32>
    %26 = vector.shape_cast %25 : vector<16xf32> to vector<1x16xf32>
    %27 = vector.broadcast %23 : vector<8x1xf32> to vector<8x16xf32>
    %28 = vector.broadcast %26 : vector<1x16xf32> to vector<8x16xf32>
    %29 = arith.addf %27, %28 : vector<8x16xf32>
    %cst_6 = arith.constant 2.000000e+00 : f32
    %30 = vector.broadcast %cst_6 : f32 to vector<8x16xf32>
    %31 = arith.mulf %30, %20 : vector<8x16xf32>
    %32 = arith.subf %29, %31 : vector<8x16xf32>
    %cst_7 = arith.constant 1.600000e-01 : f32
    %33 = vector.broadcast %cst_7 : f32 to vector<8x16xf32>
    %34 = arith.cmpf ole, %32, %33 : vector<8x16xf32>
    %35 = arith.extui %34 : vector<8x16xi1> to vector<8x16xi8>
    %c0_8 = arith.constant 0 : index
    %c0_9 = arith.constant 0 : index
    %c0_10 = arith.constant 0 : index
    %36 = vector.load %arg4[%c0_8, %c0_9, %c0_10] : memref<1x8x16xi8, #tpu.memory_space<vmem>>, vector<1x8x16xi8>
    %37 = vector.shape_cast %36 : vector<1x8x16xi8> to vector<8x16xi8>
    %38 = vector.shape_cast %35 : vector<8x16xi8> to vector<1x8x16xi8>
    tpu.vector_store %arg4[%c0_8, %c0_9, %c0_10], %38 {strides = array<i32>} : memref<1x8x16xi8, #tpu.memory_space<vmem>>, vector<1x8x16xi8>,
    %cst_11 = arith.constant 6.400000e-01 : f32
    %39 = vector.broadcast %cst_11 : f32 to vector<8x16xf32>
    %40 = arith.cmpf ole, %32, %39 : vector<8x16xf32>
    %41 = arith.extui %40 : vector<8x16xi1> to vector<8x16xi8>
    %c0_12 = arith.constant 0 : index
    %c0_13 = arith.constant 0 : index
    %c0_14 = arith.constant 0 : index
    %42 = vector.load %arg5[%c0_12, %c0_13, %c0_14] : memref<1x8x16xi8, #tpu.memory_space<vmem>>, vector<1x8x16xi8>
    %43 = vector.shape_cast %42 : vector<1x8x16xi8> to vector<8x16xi8>
    %44 = vector.shape_cast %41 : vector<8x16xi8> to vector<1x8x16xi8>
    tpu.vector_store %arg5[%c0_12, %c0_13, %c0_14], %44 {strides = array<i32>} : memref<1x8x16xi8, #tpu.memory_space<vmem>>, vector<1x8x16xi8>,
    return
  }
  func.func @transform_0(%arg0: i32, %arg1: i32) -> (i32, i32, i32) {
    %c0_i32 = arith.constant 0 : i32
    %c0_i32_0 = arith.constant 0 : i32
    %c0_i32_1 = arith.constant 0 : i32
    return %arg0, %c0_i32, %c0_i32_0 : i32, i32, i32
  }
  func.func @transform_1(%arg0: i32, %arg1: i32) -> (i32, i32, i32) {
    %c0_i32 = arith.constant 0 : i32
    %c0_i32_0 = arith.constant 0 : i32
    return %arg0, %c0_i32, %arg1 : i32, i32, i32
  }
  func.func @transform_2(%arg0: i32, %arg1: i32) -> (i32, i32, i32) {
    %c0_i32 = arith.constant 0 : i32
    %c0_i32_0 = arith.constant 0 : i32
    return %arg0, %c0_i32, %arg1 : i32, i32, i32
  }
  func.func @transform_3(%arg0: i32, %arg1: i32) -> (i32, i32, i32) {
    %c0_i32 = arith.constant 0 : i32
    %c0_i32_0 = arith.constant 0 : i32
    return %arg0, %c0_i32, %arg1 : i32, i32, i32
  }
}

module attributes {stable_mosaic.version = 11 : i64} {
  func.func @kernel(%arg0: i32, %arg1: i32, %arg2: memref<1x32x7xbf16, #tpu.memory_space<vmem>>, %arg3: memref<7x8xbf16, #tpu.memory_space<vmem>>, %arg4: memref<1x8xf32, #tpu.memory_space<vmem>>, %arg5: memref<8x16xbf16, #tpu.memory_space<vmem>>, %arg6: memref<1x16xf32, #tpu.memory_space<vmem>>, %arg7: memref<1x16x8xf32, #tpu.memory_space<vmem>>) attributes {dimension_semantics = [#tpu.dimension_semantics<parallel>, #tpu.dimension_semantics<parallel>], iteration_bounds = array<i64: 2, 1>, scalar_prefetch = 0 : i64, scratch_operands = 0 : i64, tpu.core_type = #tpu.core_type<tc>, window_params = [{transform_indices = @transform_0, window_bounds = array<i64: 1, 32, 7>}, {pipeline_mode = #tpu.pipeline_mode<synchronous>, transform_indices = @transform_1, window_bounds = array<i64: 7, 8>}, {pipeline_mode = #tpu.pipeline_mode<synchronous>, transform_indices = @transform_2, window_bounds = array<i64: 1, 8>}, {pipeline_mode = #tpu.pipeline_mode<synchronous>, transform_indices = @transform_3, window_bounds = array<i64: 8, 16>}, {pipeline_mode = #tpu.pipeline_mode<synchronous>, transform_indices = @transform_4, window_bounds = array<i64: 1, 16>}, {transform_indices = @transform_5, window_bounds = array<i64: 1, 16, 8>}]} {
    %c0 = arith.constant 0 : index
    %c0_0 = arith.constant 0 : index
    %c0_1 = arith.constant 0 : index
    %0 = vector.load %arg2[%c0, %c0_0, %c0_1] : memref<1x32x7xbf16, #tpu.memory_space<vmem>>, vector<1x32x7xbf16>
    %1 = vector.shape_cast %0 : vector<1x32x7xbf16> to vector<32x7xbf16>
    %c0_2 = arith.constant 0 : index
    %c0_3 = arith.constant 0 : index
    %2 = vector.load %arg3[%c0_2, %c0_3] : memref<7x8xbf16, #tpu.memory_space<vmem>>, vector<7x8xbf16>
    %c0_4 = arith.constant 0 : index
    %c0_5 = arith.constant 0 : index
    %3 = vector.load %arg4[%c0_4, %c0_5] : memref<1x8xf32, #tpu.memory_space<vmem>>, vector<1x8xf32>
    %cst = arith.constant dense<0.000000e+00> : vector<32x8xf32>
    %4 = tpu.matmul %1, %2, %cst {dimension_numbers = #tpu.dot_dimension_numbers<[1], [0], [0], [1], [0, 0, 1, 1], [], []>} : vector<32x7xbf16>, vector<7x8xbf16>, vector<32x8xf32> -> vector<32x8xf32>
    %5 = vector.broadcast %3 : vector<1x8xf32> to vector<32x8xf32>
    %6 = arith.addf %4, %5 : vector<32x8xf32>
    %cst_6 = arith.constant 0.000000e+00 : f32
    %7 = vector.broadcast %cst_6 : f32 to vector<32x8xf32>
    %8 = arith.maximumf %6, %7 : vector<32x8xf32>
    %9 = arith.truncf %8 : vector<32x8xf32> to vector<32x8xbf16>
    %c0_7 = arith.constant 0 : index
    %c0_8 = arith.constant 0 : index
    %10 = vector.load %arg5[%c0_7, %c0_8] : memref<8x16xbf16, #tpu.memory_space<vmem>>, vector<8x16xbf16>
    %c0_9 = arith.constant 0 : index
    %c0_10 = arith.constant 0 : index
    %11 = vector.load %arg6[%c0_9, %c0_10] : memref<1x16xf32, #tpu.memory_space<vmem>>, vector<1x16xf32>
    %cst_11 = arith.constant dense<0.000000e+00> : vector<32x16xf32>
    %12 = tpu.matmul %9, %10, %cst_11 {dimension_numbers = #tpu.dot_dimension_numbers<[1], [0], [0], [1], [0, 0, 1, 1], [], []>} : vector<32x8xbf16>, vector<8x16xbf16>, vector<32x16xf32> -> vector<32x16xf32>
    %13 = vector.broadcast %11 : vector<1x16xf32> to vector<32x16xf32>
    %14 = arith.addf %12, %13 : vector<32x16xf32>
    %cst_12 = arith.constant 0.000000e+00 : f32
    %15 = vector.broadcast %cst_12 : f32 to vector<32x16xf32>
    %16 = arith.maximumf %14, %15 : vector<32x16xf32>
    %17 = vector.shape_cast %16 : vector<32x16xf32> to vector<8x4x16xf32>
    %cst_13 = arith.constant dense<0xFF800000> : vector<8x16xf32>
    %18 = vector.multi_reduction <maximumf>, %17, %cst_13 [1] : vector<8x4x16xf32> to vector<8x16xf32>
    %19 = tpu.transpose %18, [1, 0] : vector<8x16xf32> -> vector<16x8xf32>
    %c0_14 = arith.constant 0 : index
    %c0_15 = arith.constant 0 : index
    %c0_16 = arith.constant 0 : index
    %20 = vector.load %arg7[%c0_14, %c0_15, %c0_16] : memref<1x16x8xf32, #tpu.memory_space<vmem>>, vector<1x16x8xf32>
    %21 = vector.shape_cast %20 : vector<1x16x8xf32> to vector<16x8xf32>
    %22 = vector.shape_cast %19 : vector<16x8xf32> to vector<1x16x8xf32>
    tpu.vector_store %arg7[%c0_14, %c0_15, %c0_16], %22 {strides = array<i32>} : memref<1x16x8xf32, #tpu.memory_space<vmem>>, vector<1x16x8xf32>,
    return
  }
  func.func @transform_0(%arg0: i32, %arg1: i32) -> (i32, i32, i32) {
    %c0_i32 = arith.constant 0 : i32
    %c0_i32_0 = arith.constant 0 : i32
    return %arg0, %arg1, %c0_i32 : i32, i32, i32
  }
  func.func @transform_1(%arg0: i32, %arg1: i32) -> (i32, i32) {
    %c0_i32 = arith.constant 0 : i32
    %c0_i32_0 = arith.constant 0 : i32
    %c0_i32_1 = arith.constant 0 : i32
    return %c0_i32, %c0_i32_0 : i32, i32
  }
  func.func @transform_2(%arg0: i32, %arg1: i32) -> (i32, i32) {
    %c0_i32 = arith.constant 0 : i32
    %c0_i32_0 = arith.constant 0 : i32
    %c0_i32_1 = arith.constant 0 : i32
    return %c0_i32, %c0_i32_0 : i32, i32
  }
  func.func @transform_3(%arg0: i32, %arg1: i32) -> (i32, i32) {
    %c0_i32 = arith.constant 0 : i32
    %c0_i32_0 = arith.constant 0 : i32
    %c0_i32_1 = arith.constant 0 : i32
    return %c0_i32, %c0_i32_0 : i32, i32
  }
  func.func @transform_4(%arg0: i32, %arg1: i32) -> (i32, i32) {
    %c0_i32 = arith.constant 0 : i32
    %c0_i32_0 = arith.constant 0 : i32
    %c0_i32_1 = arith.constant 0 : i32
    return %c0_i32, %c0_i32_0 : i32, i32
  }
  func.func @transform_5(%arg0: i32, %arg1: i32) -> (i32, i32, i32) {
    %c0_i32 = arith.constant 0 : i32
    %c0_i32_0 = arith.constant 0 : i32
    return %arg0, %c0_i32, %arg1 : i32, i32, i32
  }
}

module attributes {stable_mosaic.version = 11 : i64} {
  func.func @kernel(%arg0: i32, %arg1: i32, %arg2: memref<1x64x7xbf16, #tpu.memory_space<vmem>>, %arg3: memref<7x8xbf16, #tpu.memory_space<vmem>>, %arg4: memref<1x8xf32, #tpu.memory_space<vmem>>, %arg5: memref<8x32xbf16, #tpu.memory_space<vmem>>, %arg6: memref<1x32xf32, #tpu.memory_space<vmem>>, %arg7: memref<1x32x8xf32, #tpu.memory_space<vmem>>) attributes {dimension_semantics = [#tpu.dimension_semantics<parallel>, #tpu.dimension_semantics<parallel>], iteration_bounds = array<i64: 2, 1>, scalar_prefetch = 0 : i64, scratch_operands = 0 : i64, tpu.core_type = #tpu.core_type<tc>, window_params = [{transform_indices = @transform_0, window_bounds = array<i64: 1, 64, 7>}, {pipeline_mode = #tpu.pipeline_mode<synchronous>, transform_indices = @transform_1, window_bounds = array<i64: 7, 8>}, {pipeline_mode = #tpu.pipeline_mode<synchronous>, transform_indices = @transform_2, window_bounds = array<i64: 1, 8>}, {pipeline_mode = #tpu.pipeline_mode<synchronous>, transform_indices = @transform_3, window_bounds = array<i64: 8, 32>}, {pipeline_mode = #tpu.pipeline_mode<synchronous>, transform_indices = @transform_4, window_bounds = array<i64: 1, 32>}, {transform_indices = @transform_5, window_bounds = array<i64: 1, 32, 8>}]} {
    %c0 = arith.constant 0 : index
    %c0_0 = arith.constant 0 : index
    %c0_1 = arith.constant 0 : index
    %0 = vector.load %arg2[%c0, %c0_0, %c0_1] : memref<1x64x7xbf16, #tpu.memory_space<vmem>>, vector<1x64x7xbf16>
    %1 = vector.shape_cast %0 : vector<1x64x7xbf16> to vector<64x7xbf16>
    %c0_2 = arith.constant 0 : index
    %c0_3 = arith.constant 0 : index
    %2 = vector.load %arg3[%c0_2, %c0_3] : memref<7x8xbf16, #tpu.memory_space<vmem>>, vector<7x8xbf16>
    %c0_4 = arith.constant 0 : index
    %c0_5 = arith.constant 0 : index
    %3 = vector.load %arg4[%c0_4, %c0_5] : memref<1x8xf32, #tpu.memory_space<vmem>>, vector<1x8xf32>
    %cst = arith.constant dense<0.000000e+00> : vector<64x8xf32>
    %4 = tpu.matmul %1, %2, %cst {dimension_numbers = #tpu.dot_dimension_numbers<[1], [0], [0], [1], [0, 0, 1, 1], [], []>} : vector<64x7xbf16>, vector<7x8xbf16>, vector<64x8xf32> -> vector<64x8xf32>
    %5 = vector.broadcast %3 : vector<1x8xf32> to vector<64x8xf32>
    %6 = arith.addf %4, %5 : vector<64x8xf32>
    %cst_6 = arith.constant 0.000000e+00 : f32
    %7 = vector.broadcast %cst_6 : f32 to vector<64x8xf32>
    %8 = arith.maximumf %6, %7 : vector<64x8xf32>
    %9 = arith.truncf %8 : vector<64x8xf32> to vector<64x8xbf16>
    %c0_7 = arith.constant 0 : index
    %c0_8 = arith.constant 0 : index
    %10 = vector.load %arg5[%c0_7, %c0_8] : memref<8x32xbf16, #tpu.memory_space<vmem>>, vector<8x32xbf16>
    %c0_9 = arith.constant 0 : index
    %c0_10 = arith.constant 0 : index
    %11 = vector.load %arg6[%c0_9, %c0_10] : memref<1x32xf32, #tpu.memory_space<vmem>>, vector<1x32xf32>
    %cst_11 = arith.constant dense<0.000000e+00> : vector<64x32xf32>
    %12 = tpu.matmul %9, %10, %cst_11 {dimension_numbers = #tpu.dot_dimension_numbers<[1], [0], [0], [1], [0, 0, 1, 1], [], []>} : vector<64x8xbf16>, vector<8x32xbf16>, vector<64x32xf32> -> vector<64x32xf32>
    %13 = vector.broadcast %11 : vector<1x32xf32> to vector<64x32xf32>
    %14 = arith.addf %12, %13 : vector<64x32xf32>
    %cst_12 = arith.constant 0.000000e+00 : f32
    %15 = vector.broadcast %cst_12 : f32 to vector<64x32xf32>
    %16 = arith.maximumf %14, %15 : vector<64x32xf32>
    %17 = vector.shape_cast %16 : vector<64x32xf32> to vector<8x8x32xf32>
    %cst_13 = arith.constant dense<0xFF800000> : vector<8x32xf32>
    %18 = vector.multi_reduction <maximumf>, %17, %cst_13 [1] : vector<8x8x32xf32> to vector<8x32xf32>
    %19 = tpu.transpose %18, [1, 0] : vector<8x32xf32> -> vector<32x8xf32>
    %c0_14 = arith.constant 0 : index
    %c0_15 = arith.constant 0 : index
    %c0_16 = arith.constant 0 : index
    %20 = vector.load %arg7[%c0_14, %c0_15, %c0_16] : memref<1x32x8xf32, #tpu.memory_space<vmem>>, vector<1x32x8xf32>
    %21 = vector.shape_cast %20 : vector<1x32x8xf32> to vector<32x8xf32>
    %22 = vector.shape_cast %19 : vector<32x8xf32> to vector<1x32x8xf32>
    tpu.vector_store %arg7[%c0_14, %c0_15, %c0_16], %22 {strides = array<i32>} : memref<1x32x8xf32, #tpu.memory_space<vmem>>, vector<1x32x8xf32>,
    return
  }
  func.func @transform_0(%arg0: i32, %arg1: i32) -> (i32, i32, i32) {
    %c0_i32 = arith.constant 0 : i32
    %c0_i32_0 = arith.constant 0 : i32
    return %arg0, %arg1, %c0_i32 : i32, i32, i32
  }
  func.func @transform_1(%arg0: i32, %arg1: i32) -> (i32, i32) {
    %c0_i32 = arith.constant 0 : i32
    %c0_i32_0 = arith.constant 0 : i32
    %c0_i32_1 = arith.constant 0 : i32
    return %c0_i32, %c0_i32_0 : i32, i32
  }
  func.func @transform_2(%arg0: i32, %arg1: i32) -> (i32, i32) {
    %c0_i32 = arith.constant 0 : i32
    %c0_i32_0 = arith.constant 0 : i32
    %c0_i32_1 = arith.constant 0 : i32
    return %c0_i32, %c0_i32_0 : i32, i32
  }
  func.func @transform_3(%arg0: i32, %arg1: i32) -> (i32, i32) {
    %c0_i32 = arith.constant 0 : i32
    %c0_i32_0 = arith.constant 0 : i32
    %c0_i32_1 = arith.constant 0 : i32
    return %c0_i32, %c0_i32_0 : i32, i32
  }
  func.func @transform_4(%arg0: i32, %arg1: i32) -> (i32, i32) {
    %c0_i32 = arith.constant 0 : i32
    %c0_i32_0 = arith.constant 0 : i32
    %c0_i32_1 = arith.constant 0 : i32
    return %c0_i32, %c0_i32_0 : i32, i32
  }
  func.func @transform_5(%arg0: i32, %arg1: i32) -> (i32, i32, i32) {
    %c0_i32 = arith.constant 0 : i32
    %c0_i32_0 = arith.constant 0 : i32
    return %arg0, %c0_i32, %arg1 : i32, i32, i32
  }
}

</mosaic_0001>

<llo_original>
// kernel: custom-call.12
$region0: #{custom-call.12}
  %s0 = inlined_call_operand.vmem [shape: f32[2,16], index: 0, kind: output, shape index: {}]

// kernel: pointnet_sa_msg_forward.3
$region0: #{pointnet_sa_msg_forward.3}
  #allocation0 [shape = 'u32[]', space=smem, size = 0x4, offset = 0x4, fixed_abs, tag = 'smem constant byte address 0x4 - core index']
  #allocation1 [shape = 'u32[144,128]{1,0:T(1,128)}', space=vmem, size = 0x12000, scoped, tag = 'internal scratch']
  %s0 = inlined_call_operand.vmem [shape: f32[2,8,3], index: 0, kind: input, shape index: {}]
  %s1 = inlined_call_operand.vmem [shape: f32[2,3,16], index: 1, kind: input, shape index: {}]
  %s2 = inlined_call_operand.vmem [shape: s8[2,8,16], index: 2, kind: output, shape index: {0}]
  %s3 = inlined_call_operand.vmem [shape: s8[2,8,16], index: 3, kind: output, shape index: {1}]
  %4 = xla_tuple %s2, %s3
  %s5 = sld [smem:[#allocation0]]
  $region49: #{pointnet_sa_msg_forward.3} parent=0
    _
  %s7 = ssub.s32 1, %s5
  %s8 = scalar_select 0, %s7, %s5
  loop: start=0, step=1, limit=4
  $region2: #{pointnet_sa_msg_forward.3} parent=0 // loop_pre_header
    _
  $region3: #{pointnet_sa_msg_forward.3} parent=0 // loop_header
    %s10 = sphi 0, %s14
    %p11 = scmp.ge.s32.totalorder %s10, 4
    %s17 = sphi 0, %s29
    %s18 = sphi 0, %s25
    %s19 = sphi 0, %s17
    %s20 = sphi 0, %s18
    %s21 = sphi 0, %s19
    %s22 = sphi 0, %s20
    %s32 = sphi 0, %s34
    %s35 = sphi 0, %s32
    %s36 = sphi 0, %s35
    %s52 = sphi 0, %s36
    %s60 = sphi 0, %s62
    %s63 = sphi 0, %s60
    %s64 = sphi 0, %s63
    %s80 = sphi 0, %s64
    %s88 = sphi 0, %s90
    %s91 = sphi 0, %s88
    %s92 = sphi 0, %s91
    %s108 = sphi 0, %s92
    %s116 = sphi 0, %s118
    %s119 = sphi 0, %s116
    %s120 = sphi 0, %s119
    %s136 = sphi 0, %s120
  $region4: #{pointnet_sa_msg_forward.3} parent=0 // loop_header_branch
    %13 = sbr.rel (%p11) target = $region8
  $region5: #{pointnet_sa_msg_forward.3} parent=0 // loop_body
    %s15 = ssub.s32 %s10, 1
    %s16 = ssub.s32 %s10, 2
    %s23 = sadd.s32 1, %s18
    %p24 = scmp.ge.s32.totalorder %s23, 1
    %s25 = scalar_select %p24, 0, %s23
    %s26 = sadd.s32 1, %s17
    %s27 = scalar_select %p24, %s26, %s17
    %p28 = scmp.ge.s32.totalorder %s27, 2
    %s29 = scalar_select %p28, 0, %s27
    %s30 = ssub.s32 %s17, %s29
    %p31 = scmp.eq.s32.totalorder %s30, 0
    %s33 = sadd.s32 %s32, 1
    %s34 = scalar_select %p31, %s32, %s33
    %p37 = pneg %p31
    %p38 = scmp.eq.s32.totalorder %s10, 1
    %p39 = por %p37, %p38
    %p40 = scmp.ne.s32.totalorder %s32, %s35
    %p41 = scmp.eq.s32.totalorder %s10, 0
    %p42 = por %p40, %p41
    %p43 = scmp.ne.s32.totalorder %s32, %s35
    %p44 = scmp.eq.s32.totalorder %s15, 1
    %p45 = por %p43, %p44
    %p46 = scmp.ne.s32.totalorder %s35, %s36
    %p47 = scmp.eq.s32.totalorder %s15, 0
    %p48 = por %p46, %p47
    %p49 = scmp.ne.s32.totalorder %s35, %s36
    %p50 = scmp.eq.s32.totalorder %s16, 1
    %p51 = por %p49, %p50
    %p53 = scmp.ne.s32.totalorder %s36, %s52
    %p54 = scmp.eq.s32.totalorder %s16, 0
    %p55 = por %p53, %p54
    %s56 = ssub.s32 %s17, %s29
    %s57 = ssub.s32 %s18, %s25
    %s58 = sor.u32 %s56, %s57
    %p59 = scmp.eq.s32.totalorder %s58, 0
    %s61 = sadd.s32 %s60, 1
    %s62 = scalar_select %p59, %s60, %s61
    %p65 = pneg %p59
    %p66 = scmp.eq.s32.totalorder %s10, 1
    %p67 = por %p65, %p66
    %p68 = scmp.ne.s32.totalorder %s60, %s63
    %p69 = scmp.eq.s32.totalorder %s10, 0
    %p70 = por %p68, %p69
    %p71 = scmp.ne.s32.totalorder %s60, %s63
    %p72 = scmp.eq.s32.totalorder %s15, 1
    %p73 = por %p71, %p72
    %p74 = scmp.ne.s32.totalorder %s63, %s64
    %p75 = scmp.eq.s32.totalorder %s15, 0
    %p76 = por %p74, %p75
    %p77 = scmp.ne.s32.totalorder %s63, %s64
    %p78 = scmp.eq.s32.totalorder %s16, 1
    %p79 = por %p77, %p78
    %p81 = scmp.ne.s32.totalorder %s64, %s80
    %p82 = scmp.eq.s32.totalorder %s16, 0
    %p83 = por %p81, %p82
    %s84 = ssub.s32 %s17, %s29
    %s85 = ssub.s32 %s18, %s25
    %s86 = sor.u32 %s84, %s85
    %p87 = scmp.eq.s32.totalorder %s86, 0
    %s89 = sadd.s32 %s88, 1
    %s90 = scalar_select %p87, %s88, %s89
    %p93 = pneg %p87
    %p94 = scmp.eq.s32.totalorder %s10, 1
    %p95 = por %p93, %p94
    %p96 = scmp.ne.s32.totalorder %s88, %s91
    %p97 = scmp.eq.s32.totalorder %s10, 0
    %p98 = por %p96, %p97
    %p99 = scmp.ne.s32.totalorder %s88, %s91
    %p100 = scmp.eq.s32.totalorder %s15, 1
    %p101 = por %p99, %p100
    %p102 = scmp.ne.s32.totalorder %s91, %s92
    %p103 = scmp.eq.s32.totalorder %s15, 0
    %p104 = por %p102, %p103
    %p105 = scmp.ne.s32.totalorder %s91, %s92
    %p106 = scmp.eq.s32.totalorder %s16, 1
    %p107 = por %p105, %p106
    %p109 = scmp.ne.s32.totalorder %s92, %s108
    %p110 = scmp.eq.s32.totalorder %s16, 0
    %p111 = por %p109, %p110
    %s112 = ssub.s32 %s17, %s29
    %s113 = ssub.s32 %s18, %s25
    %s114 = sor.u32 %s112, %s113
    %p115 = scmp.eq.s32.totalorder %s114, 0
    %s117 = sadd.s32 %s116, 1
    %s118 = scalar_select %p115, %s116, %s117
    %p121 = pneg %p115
    %p122 = scmp.eq.s32.totalorder %s10, 1
    %p123 = por %p121, %p122
    %p124 = scmp.ne.s32.totalorder %s116, %s119
    %p125 = scmp.eq.s32.totalorder %s10, 0
    %p126 = por %p124, %p125
    %p127 = scmp.ne.s32.totalorder %s116, %s119
    %p128 = scmp.eq.s32.totalorder %s15, 1
    %p129 = por %p127, %p128
    %p130 = scmp.ne.s32.totalorder %s119, %s120
    %p131 = scmp.eq.s32.totalorder %s15, 0
    %p132 = por %p130, %p131
    %p133 = scmp.ne.s32.totalorder %s119, %s120
    %p134 = scmp.eq.s32.totalorder %s16, 1
    %p135 = por %p133, %p134
    %p137 = scmp.ne.s32.totalorder %s120, %s136
    %p138 = scmp.eq.s32.totalorder %s16, 0
    %p139 = por %p137, %p138
    %p140 = scmp.le.s32.totalorder 1, %s10
    %p141 = scmp.lt.s32.totalorder %s10, 3
    %p142 = pnand %p140, %p141
    %p143 = pneg %p142
    // Predicated region
    $region9: #{pointnet_sa_msg_forward.3} parent=5 // pred_check
      _
    $region10: #{pointnet_sa_msg_forward.3} parent=5 // pred_check_branch
      %145 = sbr.rel (%p142) target = $region12
    $region11: #{pointnet_sa_msg_forward.3} parent=5 // pred_region
      %s146 = ssub.s32 %s10, 1
    $region12: #{pointnet_sa_msg_forward.3} parent=5 // pred_fallthru
      _
    %p147 = scmp.lt.s32.totalorder %s10, 2
    // Predicated region
    $region13: #{pointnet_sa_msg_forward.3} parent=5 // pred_check
      %p148 = pneg %p147
    $region14: #{pointnet_sa_msg_forward.3} parent=5 // pred_check_branch
      %150 = sbr.rel (%p148) target = $region16
    $region15: #{pointnet_sa_msg_forward.3} parent=5 // pred_region
      // Predicated region
      $region17: #{pointnet_sa_msg_forward.3} parent=15 // pred_check
        %p151 = pneg %p42
      $region18: #{pointnet_sa_msg_forward.3} parent=15 // pred_check_branch
        %153 = sbr.rel (%p151) target = $region20
      $region19: #{pointnet_sa_msg_forward.3} parent=15 // pred_region
        %p154 = scmp.lt.s32.totalorder %s17, 1
        %s155 = scalar_select %p154, %s17, 1
        %s156 = smul.addr %s155, 8
        %s157 = scalar_lea.vmem %s0, %s156
      $region20: #{pointnet_sa_msg_forward.3} parent=15 // pred_fallthru
        _
      // Predicated region
      $region21: #{pointnet_sa_msg_forward.3} parent=15 // pred_check
        %p158 = pneg %p70
      $region22: #{pointnet_sa_msg_forward.3} parent=15 // pred_check_branch
        %160 = sbr.rel (%p158) target = $region24
      $region23: #{pointnet_sa_msg_forward.3} parent=15 // pred_region
        %p161 = scmp.lt.s32.totalorder %s17, 1
        %s162 = scalar_select %p161, %s17, 1
        %p163 = scmp.lt.s32.totalorder %s18, 0
        %s164 = scalar_select %p163, %s18, 0
        %s165 = sadd.s32 %s164, %s162
        %s166 = smul.addr %s165, 4
        %s167 = scalar_lea.vmem %s1, %s166
      $region24: #{pointnet_sa_msg_forward.3} parent=15 // pred_fallthru
        _
    $region16: #{pointnet_sa_msg_forward.3} parent=5 // pred_fallthru
      _
    %p168 = scmp.le.s32.totalorder 1, %s10
    %p169 = scmp.lt.s32.totalorder %s10, 3
    %p170 = pnand %p168, %p169
    %p171 = pneg %p170
    // Predicated region
    $region25: #{pointnet_sa_msg_forward.3} parent=5 // pred_check
      _
    $region26: #{pointnet_sa_msg_forward.3} parent=5 // pred_check_branch
      %173 = sbr.rel (%p170) target = $region28
    $region27: #{pointnet_sa_msg_forward.3} parent=5 // pred_region
      %s174 = ssub.s32 %s10, 1
      %p175 = scmp.lt.s32.totalorder %s19, 1
      %s176 = scalar_select %p175, %s19, 1
      %s177 = smul.addr %s176, 8
      %s178 = scalar_lea.vmem %s0, %s177
      %p179 = pneg %p48
      %p180 = pneg %p45
      %p181 = scmp.lt.s32.totalorder %s19, 1
      %s182 = scalar_select %p181, %s19, 1
      %p183 = scmp.lt.s32.totalorder %s20, 0
      %s184 = scalar_select %p183, %s20, 0
      %s185 = sadd.s32 %s184, %s182
      %s186 = smul.addr %s185, 4
      %s187 = scalar_lea.vmem %s1, %s186
      %p188 = pneg %p76
      %p189 = pneg %p73
      %p190 = pneg %p104
      %p191 = pneg %p101
      %p192 = scmp.lt.s32.totalorder %s19, 1
      %s193 = scalar_select %p192, %s19, 1
      %p194 = scmp.lt.s32.totalorder %s20, 0
      %s195 = scalar_select %p194, %s20, 0
      %s196 = sadd.s32 %s195, %s193
      %s197 = smul.addr %s196, 2
      %s198 = scalar_lea.vmem %s2, %s197
      %p199 = pneg %p132
      %p200 = pneg %p129
      %p201 = scmp.lt.s32.totalorder %s19, 1
      %s202 = scalar_select %p201, %s19, 1
      %p203 = scmp.lt.s32.totalorder %s20, 0
      %s204 = scalar_select %p203, %s20, 0
      %s205 = sadd.s32 %s204, %s202
      %s206 = smul.addr %s205, 2
      %s207 = scalar_lea.vmem %s3, %s206
      %p208 = scmp.lt.s32.totalorder %s19, 1
      %s209 = scalar_select %p208, %s19, 1
      %s210 = smul.addr %s209, 8
      %s211 = scalar_lea.vmem %s0, %s210
      %p212 = scmp.lt.s32.totalorder %s19, 1
      %s213 = scalar_select %p212, %s19, 1
      %p214 = scmp.lt.s32.totalorder %s20, 0
      %s215 = scalar_select %p214, %s20, 0
      %s216 = sadd.s32 %s215, %s213
      %s217 = smul.addr %s216, 4
      %s218 = scalar_lea.vmem %s1, %s217
      %p219 = scmp.lt.s32.totalorder %s19, 1
      %s220 = scalar_select %p219, %s19, 1
      %p221 = scmp.lt.s32.totalorder %s20, 0
      %s222 = scalar_select %p221, %s20, 0
      %s223 = sadd.s32 %s222, %s220
      %s224 = smul.addr %s223, 2
      %s225 = scalar_lea.vmem %s2, %s224
      %p226 = scmp.lt.s32.totalorder %s19, 1
      %s227 = scalar_select %p226, %s19, 1
      %p228 = scmp.lt.s32.totalorder %s20, 0
      %s229 = scalar_select %p228, %s20, 0
      %s230 = sadd.s32 %s229, %s227
      %s231 = smul.addr %s230, 2
      %s232 = scalar_lea.vmem %s3, %s231
      %v235 = vld [vmem:[%s211] sm:$0xff]
      %v236 = vld [vmem:[%s218] sm:$0x7]
      %238 = vset.pattern.permute.xlu0 0
      %239 = vperm.xlu0 %238, %v235
      %v240 = vpop.permute.xlu0 %239
      %v242 = vlaneseq
      %v243 = vshrl.u32 %v242, 7
      %v244 = vsub.s32 0, %v243
      %v245 = vrot.slane %v236, %v244
      %v246 = vmul.f32 %v240, %v245
      %247 = vset.pattern.permute.xlu0 1
      %248 = vperm.xlu0 %247, %v235
      %v249 = vpop.permute.xlu0 %248
      %v251 = vlaneseq
      %v252 = vshrl.u32 %v251, 7
      %v253 = vsub.s32 1, %v252
      %v254 = vrot.slane %v236, %v253
      %v255 = vmul.f32 %v249, %v254
      %v256 = vadd.f32 %v246, %v255
      %257 = vset.pattern.permute.xlu0 2
      %258 = vperm.xlu0 %257, %v235
      %v259 = vpop.permute.xlu0 %258
      %v261 = vlaneseq
      %v262 = vshrl.u32 %v261, 7
      %v263 = vsub.s32 2, %v262
      %v264 = vrot.slane %v236, %v263
      %v265 = vmul.f32 %v259, %v264
      %v266 = vadd.f32 %v256, %v265
      %v267 = vmul.f32 %v235, %v235
      %vm268 = vcmask 23552
      %v269 = vsel %vm268, %v267, 0.0
      %270 = vadd.xlane.f32.xlu0 %v269
      %v271 = vpop.xlane.xlu0 %270
      %v272 = vmul.f32 %v236, %v236
      %vm273 = vcmask 124928
      %v274 = vsel %vm273, %v272, 0.0
      %v275 = vrot.slane %v274, 4
      %v276 = vadd.f32 %v274, %v275
      %v277 = vrot.slane %v276, 2
      %v278 = vadd.f32 %v276, %v277
      %v279 = vrot.slane %v278, 1
      %v280 = vadd.f32 %v278, %v279
      %v281 = vadd.f32 %v271, %v280
      %v282 = vmul.f32 %v266, 2.0
      %v283 = vsub.f32 %v281, %v282
      %vm284 = vcmp.le.f32.partialorder %v283, 0.16
      %vm285 = vmpackc.low %vm284, %vm284
      %vm286 = vmpackc.even %vm285, %vm285
      %v287 = vsel %vm286, 16843009, 0
      %vm288 = vcmask 123904
      %289 = vst.msk [vmem:[%s225] sm:$0x3] %vm288, %v287
      %vm290 = vcmp.le.f32.partialorder %v283, 0.64
      %vm291 = vmpackc.low %vm290, %vm290
      %vm292 = vmpackc.even %vm291, %vm291
      %v293 = vsel %vm292, 16843009, 0
      %294 = vst.msk [vmem:[%s232] sm:$0x3] %vm288, %v293
      %p295 = scmp.lt.s32.totalorder %s19, 1
      %s296 = scalar_select %p295, %s19, 1
      %p297 = scmp.lt.s32.totalorder %s20, 0
      %s298 = scalar_select %p297, %s20, 0
      %s299 = sadd.s32 %s298, %s296
      %s300 = smul.addr %s299, 2
      %s301 = scalar_lea.vmem %s2, %s300
      %p302 = scmp.lt.s32.totalorder %s19, 1
      %s303 = scalar_select %p302, %s19, 1
      %p304 = scmp.lt.s32.totalorder %s20, 0
      %s305 = scalar_select %p304, %s20, 0
      %s306 = sadd.s32 %s305, %s303
      %s307 = smul.addr %s306, 2
      %s308 = scalar_lea.vmem %s3, %s307
      // Predicated region
      $region29: #{pointnet_sa_msg_forward.3} parent=27 // pred_check
        %p309 = pneg %p101
      $region30: #{pointnet_sa_msg_forward.3} parent=27 // pred_check_branch
        %311 = sbr.rel (%p309) target = $region32
      $region31: #{pointnet_sa_msg_forward.3} parent=27 // pred_region
        _
      $region32: #{pointnet_sa_msg_forward.3} parent=27 // pred_fallthru
        _
      // Predicated region
      $region33: #{pointnet_sa_msg_forward.3} parent=27 // pred_check
        %p312 = pneg %p129
      $region34: #{pointnet_sa_msg_forward.3} parent=27 // pred_check_branch
        %314 = sbr.rel (%p312) target = $region36
      $region35: #{pointnet_sa_msg_forward.3} parent=27 // pred_region
        _
      $region36: #{pointnet_sa_msg_forward.3} parent=27 // pred_fallthru
        _
    $region28: #{pointnet_sa_msg_forward.3} parent=5 // pred_fallthru
      _
    %p315 = scmp.le.s32.totalorder 2, %s10
    // Predicated region
    $region37: #{pointnet_sa_msg_forward.3} parent=5 // pred_check
      %p316 = pneg %p315
    $region38: #{pointnet_sa_msg_forward.3} parent=5 // pred_check_branch
      %318 = sbr.rel (%p316) target = $region40
    $region39: #{pointnet_sa_msg_forward.3} parent=5 // pred_region
      %s319 = ssub.s32 %s10, 2
      // Predicated region
      $region41: #{pointnet_sa_msg_forward.3} parent=39 // pred_check
        %p320 = pneg %p107
      $region42: #{pointnet_sa_msg_forward.3} parent=39 // pred_check_branch
        %322 = sbr.rel (%p320) target = $region44
      $region43: #{pointnet_sa_msg_forward.3} parent=39 // pred_region
        %p323 = scmp.lt.s32.totalorder %s21, 1
        %s324 = scalar_select %p323, %s21, 1
        %p325 = scmp.lt.s32.totalorder %s22, 0
        %s326 = scalar_select %p325, %s22, 0
        %s327 = sadd.s32 %s326, %s324
        %s328 = smul.addr %s327, 2
        %s329 = scalar_lea.vmem %s2, %s328
      $region44: #{pointnet_sa_msg_forward.3} parent=39 // pred_fallthru
        _
      // Predicated region
      $region45: #{pointnet_sa_msg_forward.3} parent=39 // pred_check
        %p330 = pneg %p135
      $region46: #{pointnet_sa_msg_forward.3} parent=39 // pred_check_branch
        %332 = sbr.rel (%p330) target = $region48
      $region47: #{pointnet_sa_msg_forward.3} parent=39 // pred_region
        %p333 = scmp.lt.s32.totalorder %s21, 1
        %s334 = scalar_select %p333, %s21, 1
        %p335 = scmp.lt.s32.totalorder %s22, 0
        %s336 = scalar_select %p335, %s22, 0
        %s337 = sadd.s32 %s336, %s334
        %s338 = smul.addr %s337, 2
        %s339 = scalar_lea.vmem %s3, %s338
      $region48: #{pointnet_sa_msg_forward.3} parent=39 // pred_fallthru
        _
    $region40: #{pointnet_sa_msg_forward.3} parent=5 // pred_fallthru
      _
  $region6: #{pointnet_sa_msg_forward.3} parent=0 // loop_footer
    %s14 = sadd.s32 1, %s10
  $region7: #{pointnet_sa_msg_forward.3} parent=0 // loop_footer_branch
    %9 = sbr.rel target = $region3
  $region8: #{pointnet_sa_msg_forward.3} parent=0 // loop_exit
    _

// kernel: pointnet_sa_msg_forward.4
$region0: #{pointnet_sa_msg_forward.4}
  #allocation0 [shape = 'u32[]', space=smem, size = 0x4, offset = 0x4, fixed_abs, tag = 'smem constant byte address 0x4 - core index']
  #allocation1 [shape = 'u32[144,128]{1,0:T(1,128)}', space=vmem, size = 0x12000, scoped, tag = 'internal scratch']
  %s0 = inlined_call_operand.vmem [shape: bf16[2,32,7], index: 0, kind: input, shape index: {}]
  %s1 = inlined_call_operand.vmem [shape: bf16[7,8], index: 1, kind: input, shape index: {}]
  %s2 = inlined_call_operand.vmem [shape: f32[1,8], index: 2, kind: input, shape index: {}]
  %s3 = inlined_call_operand.vmem [shape: bf16[8,16], index: 3, kind: input, shape index: {}]
  %s4 = inlined_call_operand.vmem [shape: f32[1,16], index: 4, kind: input, shape index: {}]
  %s5 = inlined_call_operand.vmem [shape: f32[2,16,8], index: 5, kind: output, shape index: {}]
  %s6 = sld [smem:[#allocation0]]
  $region53: #{pointnet_sa_msg_forward.4} parent=0
    _
  %s8 = ssub.s32 1, %s6
  %s9 = scalar_select 0, %s8, %s6
  loop: start=0, step=1, limit=4
  $region2: #{pointnet_sa_msg_forward.4} parent=0 // loop_pre_header
    _
  $region3: #{pointnet_sa_msg_forward.4} parent=0 // loop_header
    %s11 = sphi 0, %s15
    %p12 = scmp.ge.s32.totalorder %s11, 4
    %s18 = sphi 0, %s30
    %s19 = sphi 0, %s26
    %s20 = sphi 0, %s18
    %s21 = sphi 0, %s19
    %s22 = sphi 0, %s20
    %s23 = sphi 0, %s21
    %s35 = sphi 0, %s37
    %s38 = sphi 0, %s35
    %s39 = sphi 0, %s38
    %s55 = sphi 0, %s39
    %s59 = sphi 0, %s59
    %s61 = sphi 0, %s59
    %s62 = sphi 0, %s61
    %s76 = sphi 0, %s62
    %s80 = sphi 0, %s80
    %s82 = sphi 0, %s80
    %s83 = sphi 0, %s82
    %s97 = sphi 0, %s83
    %s101 = sphi 0, %s101
    %s103 = sphi 0, %s101
    %s104 = sphi 0, %s103
    %s118 = sphi 0, %s104
    %s122 = sphi 0, %s122
    %s124 = sphi 0, %s122
    %s125 = sphi 0, %s124
    %s139 = sphi 0, %s125
    %s147 = sphi 0, %s149
    %s150 = sphi 0, %s147
    %s151 = sphi 0, %s150
    %s167 = sphi 0, %s151
  $region4: #{pointnet_sa_msg_forward.4} parent=0 // loop_header_branch
    %14 = sbr.rel (%p12) target = $region8
  $region5: #{pointnet_sa_msg_forward.4} parent=0 // loop_body
    %s16 = ssub.s32 %s11, 1
    %s17 = ssub.s32 %s11, 2
    %s24 = sadd.s32 1, %s19
    %p25 = scmp.ge.s32.totalorder %s24, 1
    %s26 = scalar_select %p25, 0, %s24
    %s27 = sadd.s32 1, %s18
    %s28 = scalar_select %p25, %s27, %s18
    %p29 = scmp.ge.s32.totalorder %s28, 2
    %s30 = scalar_select %p29, 0, %s28
    %s31 = ssub.s32 %s18, %s30
    %s32 = ssub.s32 %s19, %s26
    %s33 = sor.u32 %s31, %s32
    %p34 = scmp.eq.s32.totalorder %s33, 0
    %s36 = sadd.s32 %s35, 1
    %s37 = scalar_select %p34, %s35, %s36
    %p40 = pneg %p34
    %p41 = scmp.eq.s32.totalorder %s11, 1
    %p42 = por %p40, %p41
    %p43 = scmp.ne.s32.totalorder %s35, %s38
    %p44 = scmp.eq.s32.totalorder %s11, 0
    %p45 = por %p43, %p44
    %p46 = scmp.ne.s32.totalorder %s35, %s38
    %p47 = scmp.eq.s32.totalorder %s16, 1
    %p48 = por %p46, %p47
    %p49 = scmp.ne.s32.totalorder %s38, %s39
    %p50 = scmp.eq.s32.totalorder %s16, 0
    %p51 = por %p49, %p50
    %p52 = scmp.ne.s32.totalorder %s38, %s39
    %p53 = scmp.eq.s32.totalorder %s17, 1
    %p54 = por %p52, %p53
    %p56 = scmp.ne.s32.totalorder %s39, %s55
    %p57 = scmp.eq.s32.totalorder %s17, 0
    %p58 = por %p56, %p57
    %s60 = sadd.s32 %s59, 1
    %p63 = scmp.eq.s32.totalorder %s11, 1
    %p64 = scmp.ne.s32.totalorder %s59, %s61
    %p65 = scmp.eq.s32.totalorder %s11, 0
    %p66 = por %p64, %p65
    %p67 = scmp.ne.s32.totalorder %s59, %s61
    %p68 = scmp.eq.s32.totalorder %s16, 1
    %p69 = por %p67, %p68
    %p70 = scmp.ne.s32.totalorder %s61, %s62
    %p71 = scmp.eq.s32.totalorder %s16, 0
    %p72 = por %p70, %p71
    %p73 = scmp.ne.s32.totalorder %s61, %s62
    %p74 = scmp.eq.s32.totalorder %s17, 1
    %p75 = por %p73, %p74
    %p77 = scmp.ne.s32.totalorder %s62, %s76
    %p78 = scmp.eq.s32.totalorder %s17, 0
    %p79 = por %p77, %p78
    %s81 = sadd.s32 %s80, 1
    %p84 = scmp.eq.s32.totalorder %s11, 1
    %p85 = scmp.ne.s32.totalorder %s80, %s82
    %p86 = scmp.eq.s32.totalorder %s11, 0
    %p87 = por %p85, %p86
    %p88 = scmp.ne.s32.totalorder %s80, %s82
    %p89 = scmp.eq.s32.totalorder %s16, 1
    %p90 = por %p88, %p89
    %p91 = scmp.ne.s32.totalorder %s82, %s83
    %p92 = scmp.eq.s32.totalorder %s16, 0
    %p93 = por %p91, %p92
    %p94 = scmp.ne.s32.totalorder %s82, %s83
    %p95 = scmp.eq.s32.totalorder %s17, 1
    %p96 = por %p94, %p95
    %p98 = scmp.ne.s32.totalorder %s83, %s97
    %p99 = scmp.eq.s32.totalorder %s17, 0
    %p100 = por %p98, %p99
    %s102 = sadd.s32 %s101, 1
    %p105 = scmp.eq.s32.totalorder %s11, 1
    %p106 = scmp.ne.s32.totalorder %s101, %s103
    %p107 = scmp.eq.s32.totalorder %s11, 0
    %p108 = por %p106, %p107
    %p109 = scmp.ne.s32.totalorder %s101, %s103
    %p110 = scmp.eq.s32.totalorder %s16, 1
    %p111 = por %p109, %p110
    %p112 = scmp.ne.s32.totalorder %s103, %s104
    %p113 = scmp.eq.s32.totalorder %s16, 0
    %p114 = por %p112, %p113
    %p115 = scmp.ne.s32.totalorder %s103, %s104
    %p116 = scmp.eq.s32.totalorder %s17, 1
    %p117 = por %p115, %p116
    %p119 = scmp.ne.s32.totalorder %s104, %s118
    %p120 = scmp.eq.s32.totalorder %s17, 0
    %p121 = por %p119, %p120
    %s123 = sadd.s32 %s122, 1
    %p126 = scmp.eq.s32.totalorder %s11, 1
    %p127 = scmp.ne.s32.totalorder %s122, %s124
    %p128 = scmp.eq.s32.totalorder %s11, 0
    %p129 = por %p127, %p128
    %p130 = scmp.ne.s32.totalorder %s122, %s124
    %p131 = scmp.eq.s32.totalorder %s16, 1
    %p132 = por %p130, %p131
    %p133 = scmp.ne.s32.totalorder %s124, %s125
    %p134 = scmp.eq.s32.totalorder %s16, 0
    %p135 = por %p133, %p134
    %p136 = scmp.ne.s32.totalorder %s124, %s125
    %p137 = scmp.eq.s32.totalorder %s17, 1
    %p138 = por %p136, %p137
    %p140 = scmp.ne.s32.totalorder %s125, %s139
    %p141 = scmp.eq.s32.totalorder %s17, 0
    %p142 = por %p140, %p141
    %s143 = ssub.s32 %s18, %s30
    %s144 = ssub.s32 %s19, %s26
    %s145 = sor.u32 %s143, %s144
    %p146 = scmp.eq.s32.totalorder %s145, 0
    %s148 = sadd.s32 %s147, 1
    %s149 = scalar_select %p146, %s147, %s148
    %p152 = pneg %p146
    %p153 = scmp.eq.s32.totalorder %s11, 1
    %p154 = por %p152, %p153
    %p155 = scmp.ne.s32.totalorder %s147, %s150
    %p156 = scmp.eq.s32.totalorder %s11, 0
    %p157 = por %p155, %p156
    %p158 = scmp.ne.s32.totalorder %s147, %s150
    %p159 = scmp.eq.s32.totalorder %s16, 1
    %p160 = por %p158, %p159
    %p161 = scmp.ne.s32.totalorder %s150, %s151
    %p162 = scmp.eq.s32.totalorder %s16, 0
    %p163 = por %p161, %p162
    %p164 = scmp.ne.s32.totalorder %s150, %s151
    %p165 = scmp.eq.s32.totalorder %s17, 1
    %p166 = por %p164, %p165
    %p168 = scmp.ne.s32.totalorder %s151, %s167
    %p169 = scmp.eq.s32.totalorder %s17, 0
    %p170 = por %p168, %p169
    %p171 = scmp.le.s32.totalorder 1, %s11
    %p172 = scmp.lt.s32.totalorder %s11, 3
    %p173 = pnand %p171, %p172
    %p174 = pneg %p173
    // Predicated region
    $region9: #{pointnet_sa_msg_forward.4} parent=5 // pred_check
      _
    $region10: #{pointnet_sa_msg_forward.4} parent=5 // pred_check_branch
      %176 = sbr.rel (%p173) target = $region12
    $region11: #{pointnet_sa_msg_forward.4} parent=5 // pred_region
      %s177 = ssub.s32 %s11, 1
      // Predicated region
      $region13: #{pointnet_sa_msg_forward.4} parent=11 // pred_check
        %p178 = pneg %p72
      $region14: #{pointnet_sa_msg_forward.4} parent=11 // pred_check_branch
        %180 = sbr.rel (%p178) target = $region16
      $region15: #{pointnet_sa_msg_forward.4} parent=11 // pred_region
        _
      $region16: #{pointnet_sa_msg_forward.4} parent=11 // pred_fallthru
        _
      // Predicated region
      $region17: #{pointnet_sa_msg_forward.4} parent=11 // pred_check
        %p181 = pneg %p93
      $region18: #{pointnet_sa_msg_forward.4} parent=11 // pred_check_branch
        %183 = sbr.rel (%p181) target = $region20
      $region19: #{pointnet_sa_msg_forward.4} parent=11 // pred_region
        _
      $region20: #{pointnet_sa_msg_forward.4} parent=11 // pred_fallthru
        _
      // Predicated region
      $region21: #{pointnet_sa_msg_forward.4} parent=11 // pred_check
        %p184 = pneg %p114
      $region22: #{pointnet_sa_msg_forward.4} parent=11 // pred_check_branch
        %186 = sbr.rel (%p184) target = $region24
      $region23: #{pointnet_sa_msg_forward.4} parent=11 // pred_region
        _
      $region24: #{pointnet_sa_msg_forward.4} parent=11 // pred_fallthru
        _
      // Predicated region
      $region25: #{pointnet_sa_msg_forward.4} parent=11 // pred_check
        %p187 = pneg %p135
      $region26: #{pointnet_sa_msg_forward.4} parent=11 // pred_check_branch
        %189 = sbr.rel (%p187) target = $region28
      $region27: #{pointnet_sa_msg_forward.4} parent=11 // pred_region
        _
      $region28: #{pointnet_sa_msg_forward.4} parent=11 // pred_fallthru
        _
    $region12: #{pointnet_sa_msg_forward.4} parent=5 // pred_fallthru
      _
    %p190 = scmp.lt.s32.totalorder %s11, 2
    // Predicated region
    $region29: #{pointnet_sa_msg_forward.4} parent=5 // pred_check
      %p191 = pneg %p190
    $region30: #{pointnet_sa_msg_forward.4} parent=5 // pred_check_branch
      %193 = sbr.rel (%p191) target = $region32
    $region31: #{pointnet_sa_msg_forward.4} parent=5 // pred_region
      // Predicated region
      $region33: #{pointnet_sa_msg_forward.4} parent=31 // pred_check
        %p194 = pneg %p45
      $region34: #{pointnet_sa_msg_forward.4} parent=31 // pred_check_branch
        %196 = sbr.rel (%p194) target = $region36
      $region35: #{pointnet_sa_msg_forward.4} parent=31 // pred_region
        %s197 = smul.u32 4, %s19
        %p198 = scmp.lt.s32.totalorder %s18, 1
        %s199 = scalar_select %p198, %s18, 1
        %p200 = scmp.lt.s32.totalorder %s197, 3
        %s201 = scalar_select %p200, %s197, 3
        %s202 = smul.addr %s199, 4
        %s203 = sadd.s32 %s201, %s202
        %s204 = smul.addr %s203, 4
        %s205 = scalar_lea.vmem %s0, %s204
        %s206 = smul.u32 4, %s19
      $region36: #{pointnet_sa_msg_forward.4} parent=31 // pred_fallthru
        _
    $region32: #{pointnet_sa_msg_forward.4} parent=5 // pred_fallthru
      _
    %p207 = scmp.le.s32.totalorder 1, %s11
    %p208 = scmp.lt.s32.totalorder %s11, 3
    %p209 = pnand %p207, %p208
    %p210 = pneg %p209
    // Predicated region
    $region37: #{pointnet_sa_msg_forward.4} parent=5 // pred_check
      _
    $region38: #{pointnet_sa_msg_forward.4} parent=5 // pred_check_branch
      %212 = sbr.rel (%p209) target = $region40
    $region39: #{pointnet_sa_msg_forward.4} parent=5 // pred_region
      %s213 = ssub.s32 %s11, 1
      %s214 = smul.u32 4, %s21
      %p215 = scmp.lt.s32.totalorder %s20, 1
      %s216 = scalar_select %p215, %s20, 1
      %p217 = scmp.lt.s32.totalorder %s214, 3
      %s218 = scalar_select %p217, %s214, 3
      %s219 = smul.addr %s216, 4
      %s220 = sadd.s32 %s218, %s219
      %s221 = smul.addr %s220, 4
      %s222 = scalar_lea.vmem %s0, %s221
      %p223 = pneg %p51
      %p224 = pneg %p48
      %p225 = pneg %p72
      %p226 = pneg %p69
      %p227 = pneg %p93
      %p228 = pneg %p90
      %p229 = pneg %p114
      %p230 = pneg %p111
      %p231 = pneg %p135
      %p232 = pneg %p132
      %p233 = pneg %p163
      %p234 = pneg %p160
      %p235 = scmp.lt.s32.totalorder %s20, 1
      %s236 = scalar_select %p235, %s20, 1
      %p237 = scmp.lt.s32.totalorder %s21, 0
      %s238 = scalar_select %p237, %s21, 0
      %s239 = smul.addr %s236, 2
      %s240 = sadd.s32 %s238, %s239
      %s241 = smul.addr %s240, 8
      %s242 = scalar_lea.vmem %s5, %s241
      %s243 = smul.u32 4, %s21
      %p244 = scmp.lt.s32.totalorder %s20, 1
      %s245 = scalar_select %p244, %s20, 1
      %p246 = scmp.lt.s32.totalorder %s243, 3
      %s247 = scalar_select %p246, %s243, 3
      %s248 = smul.addr %s245, 4
      %s249 = sadd.s32 %s247, %s248
      %s250 = smul.addr %s249, 4
      %s251 = scalar_lea.vmem %s0, %s250
      %s252 = smul.u32 4, %s21
      %p253 = scmp.lt.s32.totalorder %s20, 1
      %s254 = scalar_select %p253, %s20, 1
      %p255 = scmp.lt.s32.totalorder %s21, 0
      %s256 = scalar_select %p255, %s21, 0
      %s257 = smul.addr %s254, 2
      %s258 = sadd.s32 %s256, %s257
      %s259 = smul.addr %s258, 8
      %s260 = scalar_lea.vmem %s5, %s259
      %v262 = vld [vmem:[%s251] sm:$0xf]
      %v263 = vld [vmem:[%s251 + $0x4] sm:$0xf]
      %v264 = vld [vmem:[%s251 + $0x8] sm:$0xf]
      %v265 = vld [vmem:[%s251 + $0xc] sm:$0xf]
      %v266 = vld [vmem:[%s1] sm:$0xf]
      %v267 = vld [vmem:[%s2] sm:$0x1]
      %v269 = vlaneseq
      %v270 = vshrl.u32 %v269, 7
      %v271 = vsub.s32 0, %v270
      %v272 = vrot.slane %v267, %v271
      %v278 = vunpack.c.l.b16 %v262
      %v279 = vunpack.c.l.b16 %v263
      %v280 = vunpack.c.l.b16 %v264
      %v281 = vunpack.c.l.b16 %v265
      %v282 = vpack.c.b16 %v279, %v278
      %v283 = vpack.c.b16 %v281, %v280
      %vm284 = vcmask 56320
      %v286 = vsel %vm284, %v282, 0
      %v289 = vsel %vm284, %v283, 0
      %vm291 = vcmask 1042432
      %vm292 = vcmask 1043456
      %v293 = vsel %vm291, 4294967295, 65535
      %v294 = vsel %vm292, %v293, 0
      %v296 = vand.u32 %v266, %v294
      %298 = vmatprep.subr.bf16.mxu0 0
      %299 = vmatpush1.bf16.msra.mxu0 0
      %300 = vmatprep.subr.bf16.mxu0 0
      %301 = vmatpush1.bf16.msra.mxu0 0
      %302 = vmatprep.subr.bf16.mxu0 0
      %303 = vmatpush1.bf16.msra.mxu0 0
      %304 = vmatprep.subr.bf16.mxu0 0
      %305 = vmatpush1.bf16.msra.mxu0 0
      %306 = vmatprep.subr.bf16.mxu0 0
      %307 = vmatpush1.bf16.msra.mxu0 0
      %308 = vmatprep.subr.bf16.mxu0 0
      %309 = vmatpush1.bf16.msra.mxu0 0
      %310 = vmatprep.subr.bf16.mxu0 0
      %311 = vmatpush1.bf16.msra.mxu0 0
      %312 = vmatprep.subr.bf16.mxu0 0
      %313 = vmatpush1.bf16.msra.mxu0 %v296
      %314 = vmatprep.subr.bf16.mxu0 0
      %315 = vmatpush2.bf16.msra.mxu0 0
      %316 = vmatprep.subr.bf16.mxu0 0
      %317 = vmatpush2.bf16.msra.mxu0 0
      %318 = vmatprep.subr.bf16.mxu0 0
      %319 = vmatpush2.bf16.msra.mxu0 0
      %320 = vmatprep.subr.bf16.mxu0 0
      %321 = vmatpush2.bf16.msra.mxu0 0
      %322 = vmatprep.subr.bf16.mxu0 0
      %323 = vmatpush2.bf16.msra.mxu0 0
      %324 = vmatprep.subr.bf16.mxu0 0
      %325 = vmatpush2.bf16.msra.mxu0 0
      %326 = vmatprep.subr.bf16.mxu0 0
      %327 = vmatpush2.bf16.msra.mxu0 0
      %328 = vmatprep.subr.bf16.mxu0 0
      %329 = vmatpush2.bf16.msra.mxu0 0
      %330 = vmatprep.mubr.bf16.mxu0 0
      %331 = vmatmul.mubr.bf16.gmra.mxu0 %v286
      %v332 = vpop.f32.mrf.mxu0
      %v333 = vadd.f32 %v272, %v332
      %v334 = vpop.f32.mrf.mxu0
      %v335 = vpop.f32.mrf.mxu0
      %v336 = vadd.f32 %v272, %v335
      %v337 = vpop.f32.mrf.mxu0
      %338 = vmatprep.mubr.bf16.mxu0 0
      %339 = vmatmul.mubr.bf16.gmra.mxu0 %v289
      %v340 = vpop.f32.mrf.mxu0
      %v341 = vadd.f32 %v272, %v340
      %v342 = vpop.f32.mrf.mxu0
      %v343 = vpop.f32.mrf.mxu0
      %v344 = vadd.f32 %v272, %v343
      %v345 = vpop.f32.mrf.mxu0
      %346 = vdwg.mxu0
      %v347 = vmax.f32 %v333, 0.0
      %v348 = vmax.f32 %v336, 0.0
      %v349 = vmax.f32 %v341, 0.0
      %v350 = vmax.f32 %v344, 0.0
      %v351 = vpack.c.bf16 %v348, %v347
      %v352 = vpack.c.bf16 %v350, %v349
      %v353 = vld [vmem:[%s3] sm:$0xf]
      %v354 = vld [vmem:[%s4] sm:$0x1]
      %v356 = vlaneseq
      %v357 = vshrl.u32 %v356, 7
      %v358 = vsub.s32 0, %v357
      %v359 = vrot.slane %v354, %v358
      %vm361 = vcmask 64512
      %v363 = vsel %vm361, %v351, 0
      %v366 = vsel %vm361, %v352, 0
      %v369 = vsel %vm292, %v353, 0
      %371 = vmatprep.subr.bf16.mxu0 0
      %372 = vmatpush1.bf16.msra.mxu0 0
      %373 = vmatprep.subr.bf16.mxu0 0
      %374 = vmatpush1.bf16.msra.mxu0 0
      %375 = vmatprep.subr.bf16.mxu0 0
      %376 = vmatpush1.bf16.msra.mxu0 0
      %377 = vmatprep.subr.bf16.mxu0 0
      %378 = vmatpush1.bf16.msra.mxu0 0
      %379 = vmatprep.subr.bf16.mxu0 0
      %380 = vmatpush1.bf16.msra.mxu0 0
      %381 = vmatprep.subr.bf16.mxu0 0
      %382 = vmatpush1.bf16.msra.mxu0 0
      %383 = vmatprep.subr.bf16.mxu0 0
      %384 = vmatpush1.bf16.msra.mxu0 0
      %385 = vmatprep.subr.bf16.mxu0 0
      %386 = vmatpush1.bf16.msra.mxu0 %v369
      %387 = vmatprep.subr.bf16.mxu0 0
      %388 = vmatpush2.bf16.msra.mxu0 0
      %389 = vmatprep.subr.bf16.mxu0 0
      %390 = vmatpush2.bf16.msra.mxu0 0
      %391 = vmatprep.subr.bf16.mxu0 0
      %392 = vmatpush2.bf16.msra.mxu0 0
      %393 = vmatprep.subr.bf16.mxu0 0
      %394 = vmatpush2.bf16.msra.mxu0 0
      %395 = vmatprep.subr.bf16.mxu0 0
      %396 = vmatpush2.bf16.msra.mxu0 0
      %397 = vmatprep.subr.bf16.mxu0 0
      %398 = vmatpush2.bf16.msra.mxu0 0
      %399 = vmatprep.subr.bf16.mxu0 0
      %400 = vmatpush2.bf16.msra.mxu0 0
      %401 = vmatprep.subr.bf16.mxu0 0
      %402 = vmatpush2.bf16.msra.mxu0 0
      %403 = vmatprep.mubr.bf16.mxu0 0
      %404 = vmatmul.mubr.bf16.gmra.mxu0 %v363
      %v405 = vpop.f32.mrf.mxu0
      %v406 = vadd.f32 %v359, %v405
      %v407 = vpop.f32.mrf.mxu0
      %v408 = vpop.f32.mrf.mxu0
      %v409 = vadd.f32 %v359, %v408
      %v410 = vpop.f32.mrf.mxu0
      %411 = vmatprep.mubr.bf16.mxu0 0
      %412 = vmatmul.mubr.bf16.gmra.mxu0 %v366
      %v413 = vpop.f32.mrf.mxu0
      %v414 = vadd.f32 %v359, %v413
      %v415 = vpop.f32.mrf.mxu0
      %v416 = vpop.f32.mrf.mxu0
      %v417 = vadd.f32 %v359, %v416
      %v418 = vpop.f32.mrf.mxu0
      %419 = vdwg.mxu0
      %v420 = vmax.f32 %v406, 0.0
      %v421 = vmax.f32 %v409, 0.0
      %v422 = vmax.f32 %v414, 0.0
      %v423 = vmax.f32 %v417, 0.0
      %v428 = vcombine.high %v420, %v420
      %v429 = vcombine.high %v421, %v421
      %v430 = vcombine.high %v422, %v422
      %v431 = vcombine.high %v423, %v423
      %vm436 = vcmask 125952
      %v437 = vsel %vm436, %v420, -inf
      %v438 = vrot.slane %v437, 4
      %v439 = vmax.f32 %v437, %v438
      %v440 = vrot.slane %v439, 2
      %v441 = vmax.f32 %v439, %v440
      %v442 = vrot.slane %v441, 1
      %v443 = vmax.f32 %v441, %v442
      %v444 = vsel %vm436, %v428, -inf
      %v445 = vrot.slane %v444, 4
      %v446 = vmax.f32 %v444, %v445
      %v447 = vrot.slane %v446, 2
      %v448 = vmax.f32 %v446, %v447
      %v449 = vrot.slane %v448, 1
      %v450 = vmax.f32 %v448, %v449
      %v451 = vsel %vm436, %v421, -inf
      %v452 = vrot.slane %v451, 4
      %v453 = vmax.f32 %v451, %v452
      %v454 = vrot.slane %v453, 2
      %v455 = vmax.f32 %v453, %v454
      %v456 = vrot.slane %v455, 1
      %v457 = vmax.f32 %v455, %v456
      %v458 = vsel %vm436, %v429, -inf
      %v459 = vrot.slane %v458, 4
      %v460 = vmax.f32 %v458, %v459
      %v461 = vrot.slane %v460, 2
      %v462 = vmax.f32 %v460, %v461
      %v463 = vrot.slane %v462, 1
      %v464 = vmax.f32 %v462, %v463
      %v465 = vsel %vm436, %v422, -inf
      %v466 = vrot.slane %v465, 4
      %v467 = vmax.f32 %v465, %v466
      %v468 = vrot.slane %v467, 2
      %v469 = vmax.f32 %v467, %v468
      %v470 = vrot.slane %v469, 1
      %v471 = vmax.f32 %v469, %v470
      %v472 = vsel %vm436, %v430, -inf
      %v473 = vrot.slane %v472, 4
      %v474 = vmax.f32 %v472, %v473
      %v475 = vrot.slane %v474, 2
      %v476 = vmax.f32 %v474, %v475
      %v477 = vrot.slane %v476, 1
      %v478 = vmax.f32 %v476, %v477
      %v479 = vsel %vm436, %v423, -inf
      %v480 = vrot.slane %v479, 4
      %v481 = vmax.f32 %v479, %v480
      %v482 = vrot.slane %v481, 2
      %v483 = vmax.f32 %v481, %v482
      %v484 = vrot.slane %v483, 1
      %v485 = vmax.f32 %v483, %v484
      %v486 = vsel %vm436, %v431, -inf
      %v487 = vrot.slane %v486, 4
      %v488 = vmax.f32 %v486, %v487
      %v489 = vrot.slane %v488, 2
      %v490 = vmax.f32 %v488, %v489
      %v491 = vrot.slane %v490, 1
      %v492 = vmax.f32 %v490, %v491
      %vm501 = vcmask 1041409
      %v502 = vsel %vm501, %v450, %v443
      %vm503 = vcmask 1042434
      %v504 = vsel %vm503, %v457, %v502
      %vm505 = vcmask 1043459
      %v506 = vsel %vm505, %v464, %v504
      %vm507 = vcmask 1044484
      %v508 = vsel %vm507, %v471, %v506
      %vm509 = vcmask 1045509
      %v510 = vsel %vm509, %v478, %v508
      %vm511 = vcmask 1046534
      %v512 = vsel %vm511, %v485, %v510
      %vm513 = vcmask 1047559
      %v514 = vsel %vm513, %v492, %v512
      %516 = vxpose.xlu0.b32.start [1/16] %v514, 128
      %517 = vxpose.xlu0.b32.cont [2/16] 0.0, 128
      %518 = vxpose.xlu0.b32.cont [3/16] 0.0, 128
      %519 = vxpose.xlu0.b32.cont [4/16] 0.0, 128
      %520 = vxpose.xlu0.b32.cont [5/16] 0.0, 128
      %521 = vxpose.xlu0.b32.cont [6/16] 0.0, 128
      %522 = vxpose.xlu0.b32.cont [7/16] 0.0, 128
      %523 = vxpose.xlu0.b32.cont [8/16] 0.0, 128
      %524 = vxpose.xlu0.b32.cont [9/16] 0.0, 128
      %525 = vxpose.xlu0.b32.cont [10/16] 0.0, 128
      %526 = vxpose.xlu0.b32.cont [11/16] 0.0, 128
      %527 = vxpose.xlu0.b32.cont [12/16] 0.0, 128
      %528 = vxpose.xlu0.b32.cont [13/16] 0.0, 128
      %529 = vxpose.xlu0.b32.cont [14/16] 0.0, 128
      %530 = vxpose.xlu0.b32.cont [15/16] 0.0, 128
      %531 = vxpose.xlu0.b32.end [16/16] 0.0, 128
      %v532 = vpop.trf.xlu0
      %v533 = vpop.trf.xlu0
      %v534 = vpop.trf.xlu0
      %v535 = vpop.trf.xlu0
      %v536 = vpop.trf.xlu0
      %v537 = vpop.trf.xlu0
      %v538 = vpop.trf.xlu0
      %v539 = vpop.trf.xlu0
      %v540 = vpop.trf.xlu0
      %v541 = vpop.trf.xlu0
      %v542 = vpop.trf.xlu0
      %v543 = vpop.trf.xlu0
      %v544 = vpop.trf.xlu0
      %v545 = vpop.trf.xlu0
      %v546 = vpop.trf.xlu0
      %v547 = vpop.trf.xlu0
      %548 = vst.msk [vmem:[%s260] sm:$0xff] %vm361, %v532
      %549 = vst.msk [vmem:[%s260 + $0x8] sm:$0xff] %vm361, %v533
      %p550 = scmp.lt.s32.totalorder %s20, 1
      %s551 = scalar_select %p550, %s20, 1
      %p552 = scmp.lt.s32.totalorder %s21, 0
      %s553 = scalar_select %p552, %s21, 0
      %s554 = smul.addr %s551, 2
      %s555 = sadd.s32 %s553, %s554
      %s556 = smul.addr %s555, 8
      %s557 = scalar_lea.vmem %s5, %s556
      // Predicated region
      $region41: #{pointnet_sa_msg_forward.4} parent=39 // pred_check
        %p558 = pneg %p160
      $region42: #{pointnet_sa_msg_forward.4} parent=39 // pred_check_branch
        %560 = sbr.rel (%p558) target = $region44
      $region43: #{pointnet_sa_msg_forward.4} parent=39 // pred_region
        _
      $region44: #{pointnet_sa_msg_forward.4} parent=39 // pred_fallthru
        _
    $region40: #{pointnet_sa_msg_forward.4} parent=5 // pred_fallthru
      _
    %p561 = scmp.le.s32.totalorder 2, %s11
    // Predicated region
    $region45: #{pointnet_sa_msg_forward.4} parent=5 // pred_check
      %p562 = pneg %p561
    $region46: #{pointnet_sa_msg_forward.4} parent=5 // pred_check_branch
      %564 = sbr.rel (%p562) target = $region48
    $region47: #{pointnet_sa_msg_forward.4} parent=5 // pred_region
      %s565 = ssub.s32 %s11, 2
      // Predicated region
      $region49: #{pointnet_sa_msg_forward.4} parent=47 // pred_check
        %p566 = pneg %p166
      $region50: #{pointnet_sa_msg_forward.4} parent=47 // pred_check_branch
        %568 = sbr.rel (%p566) target = $region52
      $region51: #{pointnet_sa_msg_forward.4} parent=47 // pred_region
        %p569 = scmp.lt.s32.totalorder %s22, 1
        %s570 = scalar_select %p569, %s22, 1
        %p571 = scmp.lt.s32.totalorder %s23, 0
        %s572 = scalar_select %p571, %s23, 0
        %s573 = smul.addr %s570, 2
        %s574 = sadd.s32 %s572, %s573
        %s575 = smul.addr %s574, 8
        %s576 = scalar_lea.vmem %s5, %s575
      $region52: #{pointnet_sa_msg_forward.4} parent=47 // pred_fallthru
        _
    $region48: #{pointnet_sa_msg_forward.4} parent=5 // pred_fallthru
      _
  $region6: #{pointnet_sa_msg_forward.4} parent=0 // loop_footer
    %s15 = sadd.s32 1, %s11
  $region7: #{pointnet_sa_msg_forward.4} parent=0 // loop_footer_branch
    %10 = sbr.rel target = $region3
  $region8: #{pointnet_sa_msg_forward.4} parent=0 // loop_exit
    _

// kernel: pointnet_sa_msg_forward.5
$region0: #{pointnet_sa_msg_forward.5}
  #allocation0 [shape = 'u32[]', space=smem, size = 0x4, offset = 0x4, fixed_abs, tag = 'smem constant byte address 0x4 - core index']
  #allocation1 [shape = 'u32[144,128]{1,0:T(1,128)}', space=vmem, size = 0x12000, scoped, tag = 'internal scratch']
  %s0 = inlined_call_operand.vmem [shape: bf16[2,64,7], index: 0, kind: input, shape index: {}]
  %s1 = inlined_call_operand.vmem [shape: bf16[7,8], index: 1, kind: input, shape index: {}]
  %s2 = inlined_call_operand.vmem [shape: f32[1,8], index: 2, kind: input, shape index: {}]
  %s3 = inlined_call_operand.vmem [shape: bf16[8,32], index: 3, kind: input, shape index: {}]
  %s4 = inlined_call_operand.vmem [shape: f32[1,32], index: 4, kind: input, shape index: {}]
  %s5 = inlined_call_operand.vmem [shape: f32[2,32,8], index: 5, kind: output, shape index: {}]
  %s6 = sld [smem:[#allocation0]]
  $region53: #{pointnet_sa_msg_forward.5} parent=0
    _
  %s8 = ssub.s32 1, %s6
  %s9 = scalar_select 0, %s8, %s6
  loop: start=0, step=1, limit=4
  $region2: #{pointnet_sa_msg_forward.5} parent=0 // loop_pre_header
    _
  $region3: #{pointnet_sa_msg_forward.5} parent=0 // loop_header
    %s11 = sphi 0, %s15
    %p12 = scmp.ge.s32.totalorder %s11, 4
    %s18 = sphi 0, %s30
    %s19 = sphi 0, %s26
    %s20 = sphi 0, %s18
    %s21 = sphi 0, %s19
    %s22 = sphi 0, %s20
    %s23 = sphi 0, %s21
    %s35 = sphi 0, %s37
    %s38 = sphi 0, %s35
    %s39 = sphi 0, %s38
    %s55 = sphi 0, %s39
    %s59 = sphi 0, %s59
    %s61 = sphi 0, %s59
    %s62 = sphi 0, %s61
    %s76 = sphi 0, %s62
    %s80 = sphi 0, %s80
    %s82 = sphi 0, %s80
    %s83 = sphi 0, %s82
    %s97 = sphi 0, %s83
    %s101 = sphi 0, %s101
    %s103 = sphi 0, %s101
    %s104 = sphi 0, %s103
    %s118 = sphi 0, %s104
    %s122 = sphi 0, %s122
    %s124 = sphi 0, %s122
    %s125 = sphi 0, %s124
    %s139 = sphi 0, %s125
    %s147 = sphi 0, %s149
    %s150 = sphi 0, %s147
    %s151 = sphi 0, %s150
    %s167 = sphi 0, %s151
  $region4: #{pointnet_sa_msg_forward.5} parent=0 // loop_header_branch
    %14 = sbr.rel (%p12) target = $region8
  $region5: #{pointnet_sa_msg_forward.5} parent=0 // loop_body
    %s16 = ssub.s32 %s11, 1
    %s17 = ssub.s32 %s11, 2
    %s24 = sadd.s32 1, %s19
    %p25 = scmp.ge.s32.totalorder %s24, 1
    %s26 = scalar_select %p25, 0, %s24
    %s27 = sadd.s32 1, %s18
    %s28 = scalar_select %p25, %s27, %s18
    %p29 = scmp.ge.s32.totalorder %s28, 2
    %s30 = scalar_select %p29, 0, %s28
    %s31 = ssub.s32 %s18, %s30
    %s32 = ssub.s32 %s19, %s26
    %s33 = sor.u32 %s31, %s32
    %p34 = scmp.eq.s32.totalorder %s33, 0
    %s36 = sadd.s32 %s35, 1
    %s37 = scalar_select %p34, %s35, %s36
    %p40 = pneg %p34
    %p41 = scmp.eq.s32.totalorder %s11, 1
    %p42 = por %p40, %p41
    %p43 = scmp.ne.s32.totalorder %s35, %s38
    %p44 = scmp.eq.s32.totalorder %s11, 0
    %p45 = por %p43, %p44
    %p46 = scmp.ne.s32.totalorder %s35, %s38
    %p47 = scmp.eq.s32.totalorder %s16, 1
    %p48 = por %p46, %p47
    %p49 = scmp.ne.s32.totalorder %s38, %s39
    %p50 = scmp.eq.s32.totalorder %s16, 0
    %p51 = por %p49, %p50
    %p52 = scmp.ne.s32.totalorder %s38, %s39
    %p53 = scmp.eq.s32.totalorder %s17, 1
    %p54 = por %p52, %p53
    %p56 = scmp.ne.s32.totalorder %s39, %s55
    %p57 = scmp.eq.s32.totalorder %s17, 0
    %p58 = por %p56, %p57
    %s60 = sadd.s32 %s59, 1
    %p63 = scmp.eq.s32.totalorder %s11, 1
    %p64 = scmp.ne.s32.totalorder %s59, %s61
    %p65 = scmp.eq.s32.totalorder %s11, 0
    %p66 = por %p64, %p65
    %p67 = scmp.ne.s32.totalorder %s59, %s61
    %p68 = scmp.eq.s32.totalorder %s16, 1
    %p69 = por %p67, %p68
    %p70 = scmp.ne.s32.totalorder %s61, %s62
    %p71 = scmp.eq.s32.totalorder %s16, 0
    %p72 = por %p70, %p71
    %p73 = scmp.ne.s32.totalorder %s61, %s62
    %p74 = scmp.eq.s32.totalorder %s17, 1
    %p75 = por %p73, %p74
    %p77 = scmp.ne.s32.totalorder %s62, %s76
    %p78 = scmp.eq.s32.totalorder %s17, 0
    %p79 = por %p77, %p78
    %s81 = sadd.s32 %s80, 1
    %p84 = scmp.eq.s32.totalorder %s11, 1
    %p85 = scmp.ne.s32.totalorder %s80, %s82
    %p86 = scmp.eq.s32.totalorder %s11, 0
    %p87 = por %p85, %p86
    %p88 = scmp.ne.s32.totalorder %s80, %s82
    %p89 = scmp.eq.s32.totalorder %s16, 1
    %p90 = por %p88, %p89
    %p91 = scmp.ne.s32.totalorder %s82, %s83
    %p92 = scmp.eq.s32.totalorder %s16, 0
    %p93 = por %p91, %p92
    %p94 = scmp.ne.s32.totalorder %s82, %s83
    %p95 = scmp.eq.s32.totalorder %s17, 1
    %p96 = por %p94, %p95
    %p98 = scmp.ne.s32.totalorder %s83, %s97
    %p99 = scmp.eq.s32.totalorder %s17, 0
    %p100 = por %p98, %p99
    %s102 = sadd.s32 %s101, 1
    %p105 = scmp.eq.s32.totalorder %s11, 1
    %p106 = scmp.ne.s32.totalorder %s101, %s103
    %p107 = scmp.eq.s32.totalorder %s11, 0
    %p108 = por %p106, %p107
    %p109 = scmp.ne.s32.totalorder %s101, %s103
    %p110 = scmp.eq.s32.totalorder %s16, 1
    %p111 = por %p109, %p110
    %p112 = scmp.ne.s32.totalorder %s103, %s104
    %p113 = scmp.eq.s32.totalorder %s16, 0
    %p114 = por %p112, %p113
    %p115 = scmp.ne.s32.totalorder %s103, %s104
    %p116 = scmp.eq.s32.totalorder %s17, 1
    %p117 = por %p115, %p116
    %p119 = scmp.ne.s32.totalorder %s104, %s118
    %p120 = scmp.eq.s32.totalorder %s17, 0
    %p121 = por %p119, %p120
    %s123 = sadd.s32 %s122, 1
    %p126 = scmp.eq.s32.totalorder %s11, 1
    %p127 = scmp.ne.s32.totalorder %s122, %s124
    %p128 = scmp.eq.s32.totalorder %s11, 0
    %p129 = por %p127, %p128
    %p130 = scmp.ne.s32.totalorder %s122, %s124
    %p131 = scmp.eq.s32.totalorder %s16, 1
    %p132 = por %p130, %p131
    %p133 = scmp.ne.s32.totalorder %s124, %s125
    %p134 = scmp.eq.s32.totalorder %s16, 0
    %p135 = por %p133, %p134
    %p136 = scmp.ne.s32.totalorder %s124, %s125
    %p137 = scmp.eq.s32.totalorder %s17, 1
    %p138 = por %p136, %p137
    %p140 = scmp.ne.s32.totalorder %s125, %s139
    %p141 = scmp.eq.s32.totalorder %s17, 0
    %p142 = por %p140, %p141
    %s143 = ssub.s32 %s18, %s30
    %s144 = ssub.s32 %s19, %s26
    %s145 = sor.u32 %s143, %s144
    %p146 = scmp.eq.s32.totalorder %s145, 0
    %s148 = sadd.s32 %s147, 1
    %s149 = scalar_select %p146, %s147, %s148
    %p152 = pneg %p146
    %p153 = scmp.eq.s32.totalorder %s11, 1
    %p154 = por %p152, %p153
    %p155 = scmp.ne.s32.totalorder %s147, %s150
    %p156 = scmp.eq.s32.totalorder %s11, 0
    %p157 = por %p155, %p156
    %p158 = scmp.ne.s32.totalorder %s147, %s150
    %p159 = scmp.eq.s32.totalorder %s16, 1
    %p160 = por %p158, %p159
    %p161 = scmp.ne.s32.totalorder %s150, %s151
    %p162 = scmp.eq.s32.totalorder %s16, 0
    %p163 = por %p161, %p162
    %p164 = scmp.ne.s32.totalorder %s150, %s151
    %p165 = scmp.eq.s32.totalorder %s17, 1
    %p166 = por %p164, %p165
    %p168 = scmp.ne.s32.totalorder %s151, %s167
    %p169 = scmp.eq.s32.totalorder %s17, 0
    %p170 = por %p168, %p169
    %p171 = scmp.le.s32.totalorder 1, %s11
    %p172 = scmp.lt.s32.totalorder %s11, 3
    %p173 = pnand %p171, %p172
    %p174 = pneg %p173
    // Predicated region
    $region9: #{pointnet_sa_msg_forward.5} parent=5 // pred_check
      _
    $region10: #{pointnet_sa_msg_forward.5} parent=5 // pred_check_branch
      %176 = sbr.rel (%p173) target = $region12
    $region11: #{pointnet_sa_msg_forward.5} parent=5 // pred_region
      %s177 = ssub.s32 %s11, 1
      // Predicated region
      $region13: #{pointnet_sa_msg_forward.5} parent=11 // pred_check
        %p178 = pneg %p72
      $region14: #{pointnet_sa_msg_forward.5} parent=11 // pred_check_branch
        %180 = sbr.rel (%p178) target = $region16
      $region15: #{pointnet_sa_msg_forward.5} parent=11 // pred_region
        _
      $region16: #{pointnet_sa_msg_forward.5} parent=11 // pred_fallthru
        _
      // Predicated region
      $region17: #{pointnet_sa_msg_forward.5} parent=11 // pred_check
        %p181 = pneg %p93
      $region18: #{pointnet_sa_msg_forward.5} parent=11 // pred_check_branch
        %183 = sbr.rel (%p181) target = $region20
      $region19: #{pointnet_sa_msg_forward.5} parent=11 // pred_region
        _
      $region20: #{pointnet_sa_msg_forward.5} parent=11 // pred_fallthru
        _
      // Predicated region
      $region21: #{pointnet_sa_msg_forward.5} parent=11 // pred_check
        %p184 = pneg %p114
      $region22: #{pointnet_sa_msg_forward.5} parent=11 // pred_check_branch
        %186 = sbr.rel (%p184) target = $region24
      $region23: #{pointnet_sa_msg_forward.5} parent=11 // pred_region
        _
      $region24: #{pointnet_sa_msg_forward.5} parent=11 // pred_fallthru
        _
      // Predicated region
      $region25: #{pointnet_sa_msg_forward.5} parent=11 // pred_check
        %p187 = pneg %p135
      $region26: #{pointnet_sa_msg_forward.5} parent=11 // pred_check_branch
        %189 = sbr.rel (%p187) target = $region28
      $region27: #{pointnet_sa_msg_forward.5} parent=11 // pred_region
        _
      $region28: #{pointnet_sa_msg_forward.5} parent=11 // pred_fallthru
        _
    $region12: #{pointnet_sa_msg_forward.5} parent=5 // pred_fallthru
      _
    %p190 = scmp.lt.s32.totalorder %s11, 2
    // Predicated region
    $region29: #{pointnet_sa_msg_forward.5} parent=5 // pred_check
      %p191 = pneg %p190
    $region30: #{pointnet_sa_msg_forward.5} parent=5 // pred_check_branch
      %193 = sbr.rel (%p191) target = $region32
    $region31: #{pointnet_sa_msg_forward.5} parent=5 // pred_region
      // Predicated region
      $region33: #{pointnet_sa_msg_forward.5} parent=31 // pred_check
        %p194 = pneg %p45
      $region34: #{pointnet_sa_msg_forward.5} parent=31 // pred_check_branch
        %196 = sbr.rel (%p194) target = $region36
      $region35: #{pointnet_sa_msg_forward.5} parent=31 // pred_region
        %s197 = smul.u32 8, %s19
        %p198 = scmp.lt.s32.totalorder %s18, 1
        %s199 = scalar_select %p198, %s18, 1
        %p200 = scmp.lt.s32.totalorder %s197, 7
        %s201 = scalar_select %p200, %s197, 7
        %s202 = smul.addr %s199, 8
        %s203 = sadd.s32 %s201, %s202
        %s204 = smul.addr %s203, 4
        %s205 = scalar_lea.vmem %s0, %s204
        %s206 = smul.u32 8, %s19
      $region36: #{pointnet_sa_msg_forward.5} parent=31 // pred_fallthru
        _
    $region32: #{pointnet_sa_msg_forward.5} parent=5 // pred_fallthru
      _
    %p207 = scmp.le.s32.totalorder 1, %s11
    %p208 = scmp.lt.s32.totalorder %s11, 3
    %p209 = pnand %p207, %p208
    %p210 = pneg %p209
    // Predicated region
    $region37: #{pointnet_sa_msg_forward.5} parent=5 // pred_check
      _
    $region38: #{pointnet_sa_msg_forward.5} parent=5 // pred_check_branch
      %212 = sbr.rel (%p209) target = $region40
    $region39: #{pointnet_sa_msg_forward.5} parent=5 // pred_region
      %s213 = ssub.s32 %s11, 1
      %s214 = smul.u32 8, %s21
      %p215 = scmp.lt.s32.totalorder %s20, 1
      %s216 = scalar_select %p215, %s20, 1
      %p217 = scmp.lt.s32.totalorder %s214, 7
      %s218 = scalar_select %p217, %s214, 7
      %s219 = smul.addr %s216, 8
      %s220 = sadd.s32 %s218, %s219
      %s221 = smul.addr %s220, 4
      %s222 = scalar_lea.vmem %s0, %s221
      %p223 = pneg %p51
      %p224 = pneg %p48
      %p225 = pneg %p72
      %p226 = pneg %p69
      %p227 = pneg %p93
      %p228 = pneg %p90
      %p229 = pneg %p114
      %p230 = pneg %p111
      %p231 = pneg %p135
      %p232 = pneg %p132
      %p233 = pneg %p163
      %p234 = pneg %p160
      %p235 = scmp.lt.s32.totalorder %s20, 1
      %s236 = scalar_select %p235, %s20, 1
      %p237 = scmp.lt.s32.totalorder %s21, 0
      %s238 = scalar_select %p237, %s21, 0
      %s239 = smul.addr %s236, 4
      %s240 = sadd.s32 %s238, %s239
      %s241 = smul.addr %s240, 8
      %s242 = scalar_lea.vmem %s5, %s241
      %s243 = smul.u32 8, %s21
      %p244 = scmp.lt.s32.totalorder %s20, 1
      %s245 = scalar_select %p244, %s20, 1
      %p246 = scmp.lt.s32.totalorder %s243, 7
      %s247 = scalar_select %p246, %s243, 7
      %s248 = smul.addr %s245, 8
      %s249 = sadd.s32 %s247, %s248
      %s250 = smul.addr %s249, 4
      %s251 = scalar_lea.vmem %s0, %s250
      %s252 = smul.u32 8, %s21
      %p253 = scmp.lt.s32.totalorder %s20, 1
      %s254 = scalar_select %p253, %s20, 1
      %p255 = scmp.lt.s32.totalorder %s21, 0
      %s256 = scalar_select %p255, %s21, 0
      %s257 = smul.addr %s254, 4
      %s258 = sadd.s32 %s256, %s257
      %s259 = smul.addr %s258, 8
      %s260 = scalar_lea.vmem %s5, %s259
      %v262 = vld [vmem:[%s251] sm:$0xf]
      %v263 = vld [vmem:[%s251 + $0x4] sm:$0xf]
      %v264 = vld [vmem:[%s251 + $0x8] sm:$0xf]
      %v265 = vld [vmem:[%s251 + $0xc] sm:$0xf]
      %v266 = vld [vmem:[%s251 + $0x10] sm:$0xf]
      %v267 = vld [vmem:[%s251 + $0x14] sm:$0xf]
      %v268 = vld [vmem:[%s251 + $0x18] sm:$0xf]
      %v269 = vld [vmem:[%s251 + $0x1c] sm:$0xf]
      %v270 = vld [vmem:[%s1] sm:$0xf]
      %v271 = vld [vmem:[%s2] sm:$0x1]
      %v273 = vlaneseq
      %v274 = vshrl.u32 %v273, 7
      %v275 = vsub.s32 0, %v274
      %v276 = vrot.slane %v271, %v275
      %v286 = vunpack.c.l.b16 %v262
      %v287 = vunpack.c.l.b16 %v263
      %v288 = vunpack.c.l.b16 %v264
      %v289 = vunpack.c.l.b16 %v265
      %v290 = vunpack.c.l.b16 %v266
      %v291 = vunpack.c.l.b16 %v267
      %v292 = vunpack.c.l.b16 %v268
      %v293 = vunpack.c.l.b16 %v269
      %v294 = vpack.c.b16 %v287, %v286
      %v295 = vpack.c.b16 %v289, %v288
      %v296 = vpack.c.b16 %v291, %v290
      %v297 = vpack.c.b16 %v293, %v292
      %vm298 = vcmask 56320
      %v300 = vsel %vm298, %v294, 0
      %v303 = vsel %vm298, %v295, 0
      %v306 = vsel %vm298, %v296, 0
      %v309 = vsel %vm298, %v297, 0
      %vm311 = vcmask 1042432
      %vm312 = vcmask 1043456
      %v313 = vsel %vm311, 4294967295, 65535
      %v314 = vsel %vm312, %v313, 0
      %v316 = vand.u32 %v270, %v314
      %318 = vmatprep.subr.bf16.mxu0 0
      %319 = vmatpush1.bf16.msra.mxu0 0
      %320 = vmatprep.subr.bf16.mxu0 0
      %321 = vmatpush1.bf16.msra.mxu0 0
      %322 = vmatprep.subr.bf16.mxu0 0
      %323 = vmatpush1.bf16.msra.mxu0 0
      %324 = vmatprep.subr.bf16.mxu0 0
      %325 = vmatpush1.bf16.msra.mxu0 0
      %326 = vmatprep.subr.bf16.mxu0 0
      %327 = vmatpush1.bf16.msra.mxu0 0
      %328 = vmatprep.subr.bf16.mxu0 0
      %329 = vmatpush1.bf16.msra.mxu0 0
      %330 = vmatprep.subr.bf16.mxu0 0
      %331 = vmatpush1.bf16.msra.mxu0 0
      %332 = vmatprep.subr.bf16.mxu0 0
      %333 = vmatpush1.bf16.msra.mxu0 %v316
      %334 = vmatprep.subr.bf16.mxu0 0
      %335 = vmatpush2.bf16.msra.mxu0 0
      %336 = vmatprep.subr.bf16.mxu0 0
      %337 = vmatpush2.bf16.msra.mxu0 0
      %338 = vmatprep.subr.bf16.mxu0 0
      %339 = vmatpush2.bf16.msra.mxu0 0
      %340 = vmatprep.subr.bf16.mxu0 0
      %341 = vmatpush2.bf16.msra.mxu0 0
      %342 = vmatprep.subr.bf16.mxu0 0
      %343 = vmatpush2.bf16.msra.mxu0 0
      %344 = vmatprep.subr.bf16.mxu0 0
      %345 = vmatpush2.bf16.msra.mxu0 0
      %346 = vmatprep.subr.bf16.mxu0 0
      %347 = vmatpush2.bf16.msra.mxu0 0
      %348 = vmatprep.subr.bf16.mxu0 0
      %349 = vmatpush2.bf16.msra.mxu0 0
      %350 = vmatprep.mubr.bf16.mxu0 0
      %351 = vmatmul.mubr.bf16.gmra.mxu0 %v300
      %v352 = vpop.f32.mrf.mxu0
      %v353 = vadd.f32 %v276, %v352
      %v354 = vpop.f32.mrf.mxu0
      %v355 = vpop.f32.mrf.mxu0
      %v356 = vadd.f32 %v276, %v355
      %v357 = vpop.f32.mrf.mxu0
      %358 = vmatprep.mubr.bf16.mxu0 0
      %359 = vmatmul.mubr.bf16.gmra.mxu0 %v303
      %v360 = vpop.f32.mrf.mxu0
      %v361 = vadd.f32 %v276, %v360
      %v362 = vpop.f32.mrf.mxu0
      %v363 = vpop.f32.mrf.mxu0
      %v364 = vadd.f32 %v276, %v363
      %v365 = vpop.f32.mrf.mxu0
      %366 = vmatprep.mubr.bf16.mxu0 0
      %367 = vmatmul.mubr.bf16.gmra.mxu0 %v306
      %v368 = vpop.f32.mrf.mxu0
      %v369 = vadd.f32 %v276, %v368
      %v370 = vpop.f32.mrf.mxu0
      %v371 = vpop.f32.mrf.mxu0
      %v372 = vadd.f32 %v276, %v371
      %v373 = vpop.f32.mrf.mxu0
      %374 = vmatprep.mubr.bf16.mxu0 0
      %375 = vmatmul.mubr.bf16.gmra.mxu0 %v309
      %v376 = vpop.f32.mrf.mxu0
      %v377 = vadd.f32 %v276, %v376
      %v378 = vpop.f32.mrf.mxu0
      %v379 = vpop.f32.mrf.mxu0
      %v380 = vadd.f32 %v276, %v379
      %v381 = vpop.f32.mrf.mxu0
      %382 = vdwg.mxu0
      %v383 = vmax.f32 %v353, 0.0
      %v384 = vmax.f32 %v356, 0.0
      %v385 = vmax.f32 %v361, 0.0
      %v386 = vmax.f32 %v364, 0.0
      %v387 = vmax.f32 %v369, 0.0
      %v388 = vmax.f32 %v372, 0.0
      %v389 = vmax.f32 %v377, 0.0
      %v390 = vmax.f32 %v380, 0.0
      %v391 = vpack.c.bf16 %v384, %v383
      %v392 = vpack.c.bf16 %v386, %v385
      %v393 = vpack.c.bf16 %v388, %v387
      %v394 = vpack.c.bf16 %v390, %v389
      %v395 = vld [vmem:[%s3] sm:$0xf]
      %v396 = vld [vmem:[%s4] sm:$0x1]
      %v398 = vlaneseq
      %v399 = vshrl.u32 %v398, 7
      %v400 = vsub.s32 0, %v399
      %v401 = vrot.slane %v396, %v400
      %vm403 = vcmask 64512
      %v405 = vsel %vm403, %v391, 0
      %v408 = vsel %vm403, %v392, 0
      %v411 = vsel %vm403, %v393, 0
      %v414 = vsel %vm403, %v394, 0
      %v417 = vsel %vm312, %v395, 0
      %419 = vmatprep.subr.bf16.mxu0 0
      %420 = vmatpush1.bf16.msra.mxu0 0
      %421 = vmatprep.subr.bf16.mxu0 0
      %422 = vmatpush1.bf16.msra.mxu0 0
      %423 = vmatprep.subr.bf16.mxu0 0
      %424 = vmatpush1.bf16.msra.mxu0 0
      %425 = vmatprep.subr.bf16.mxu0 0
      %426 = vmatpush1.bf16.msra.mxu0 0
      %427 = vmatprep.subr.bf16.mxu0 0
      %428 = vmatpush1.bf16.msra.mxu0 0
      %429 = vmatprep.subr.bf16.mxu0 0
      %430 = vmatpush1.bf16.msra.mxu0 0
      %431 = vmatprep.subr.bf16.mxu0 0
      %432 = vmatpush1.bf16.msra.mxu0 0
      %433 = vmatprep.subr.bf16.mxu0 0
      %434 = vmatpush1.bf16.msra.mxu0 %v417
      %435 = vmatprep.subr.bf16.mxu0 0
      %436 = vmatpush2.bf16.msra.mxu0 0
      %437 = vmatprep.subr.bf16.mxu0 0
      %438 = vmatpush2.bf16.msra.mxu0 0
      %439 = vmatprep.subr.bf16.mxu0 0
      %440 = vmatpush2.bf16.msra.mxu0 0
      %441 = vmatprep.subr.bf16.mxu0 0
      %442 = vmatpush2.bf16.msra.mxu0 0
      %443 = vmatprep.subr.bf16.mxu0 0
      %444 = vmatpush2.bf16.msra.mxu0 0
      %445 = vmatprep.subr.bf16.mxu0 0
      %446 = vmatpush2.bf16.msra.mxu0 0
      %447 = vmatprep.subr.bf16.mxu0 0
      %448 = vmatpush2.bf16.msra.mxu0 0
      %449 = vmatprep.subr.bf16.mxu0 0
      %450 = vmatpush2.bf16.msra.mxu0 0
      %451 = vmatprep.mubr.bf16.mxu0 0
      %452 = vmatmul.mubr.bf16.gmra.mxu0 %v405
      %v453 = vpop.f32.mrf.mxu0
      %v454 = vadd.f32 %v401, %v453
      %v455 = vpop.f32.mrf.mxu0
      %v456 = vpop.f32.mrf.mxu0
      %v457 = vadd.f32 %v401, %v456
      %v458 = vpop.f32.mrf.mxu0
      %459 = vmatprep.mubr.bf16.mxu0 0
      %460 = vmatmul.mubr.bf16.gmra.mxu0 %v408
      %v461 = vpop.f32.mrf.mxu0
      %v462 = vadd.f32 %v401, %v461
      %v463 = vpop.f32.mrf.mxu0
      %v464 = vpop.f32.mrf.mxu0
      %v465 = vadd.f32 %v401, %v464
      %v466 = vpop.f32.mrf.mxu0
      %467 = vmatprep.mubr.bf16.mxu0 0
      %468 = vmatmul.mubr.bf16.gmra.mxu0 %v411
      %v469 = vpop.f32.mrf.mxu0
      %v470 = vadd.f32 %v401, %v469
      %v471 = vpop.f32.mrf.mxu0
      %v472 = vpop.f32.mrf.mxu0
      %v473 = vadd.f32 %v401, %v472
      %v474 = vpop.f32.mrf.mxu0
      %475 = vmatprep.mubr.bf16.mxu0 0
      %476 = vmatmul.mubr.bf16.gmra.mxu0 %v414
      %v477 = vpop.f32.mrf.mxu0
      %v478 = vadd.f32 %v401, %v477
      %v479 = vpop.f32.mrf.mxu0
      %v480 = vpop.f32.mrf.mxu0
      %v481 = vadd.f32 %v401, %v480
      %v482 = vpop.f32.mrf.mxu0
      %483 = vdwg.mxu0
      %v484 = vmax.f32 %v454, 0.0
      %v485 = vmax.f32 %v457, 0.0
      %v486 = vmax.f32 %v462, 0.0
      %v487 = vmax.f32 %v465, 0.0
      %v488 = vmax.f32 %v470, 0.0
      %v489 = vmax.f32 %v473, 0.0
      %v490 = vmax.f32 %v478, 0.0
      %v491 = vmax.f32 %v481, 0.0
      %vm492 = vcmask 261120
      %v493 = vsel %vm492, %v484, -inf
      %v494 = vrot.slane %v493, 4
      %v495 = vmax.f32 %v493, %v494
      %v496 = vrot.slane %v495, 2
      %v497 = vmax.f32 %v495, %v496
      %v498 = vrot.slane %v497, 1
      %v499 = vmax.f32 %v497, %v498
      %v500 = vsel %vm492, %v485, -inf
      %v501 = vrot.slane %v500, 4
      %v502 = vmax.f32 %v500, %v501
      %v503 = vrot.slane %v502, 2
      %v504 = vmax.f32 %v502, %v503
      %v505 = vrot.slane %v504, 1
      %v506 = vmax.f32 %v504, %v505
      %v507 = vsel %vm492, %v486, -inf
      %v508 = vrot.slane %v507, 4
      %v509 = vmax.f32 %v507, %v508
      %v510 = vrot.slane %v509, 2
      %v511 = vmax.f32 %v509, %v510
      %v512 = vrot.slane %v511, 1
      %v513 = vmax.f32 %v511, %v512
      %v514 = vsel %vm492, %v487, -inf
      %v515 = vrot.slane %v514, 4
      %v516 = vmax.f32 %v514, %v515
      %v517 = vrot.slane %v516, 2
      %v518 = vmax.f32 %v516, %v517
      %v519 = vrot.slane %v518, 1
      %v520 = vmax.f32 %v518, %v519
      %v521 = vsel %vm492, %v488, -inf
      %v522 = vrot.slane %v521, 4
      %v523 = vmax.f32 %v521, %v522
      %v524 = vrot.slane %v523, 2
      %v525 = vmax.f32 %v523, %v524
      %v526 = vrot.slane %v525, 1
      %v527 = vmax.f32 %v525, %v526
      %v528 = vsel %vm492, %v489, -inf
      %v529 = vrot.slane %v528, 4
      %v530 = vmax.f32 %v528, %v529
      %v531 = vrot.slane %v530, 2
      %v532 = vmax.f32 %v530, %v531
      %v533 = vrot.slane %v532, 1
      %v534 = vmax.f32 %v532, %v533
      %v535 = vsel %vm492, %v490, -inf
      %v536 = vrot.slane %v535, 4
      %v537 = vmax.f32 %v535, %v536
      %v538 = vrot.slane %v537, 2
      %v539 = vmax.f32 %v537, %v538
      %v540 = vrot.slane %v539, 1
      %v541 = vmax.f32 %v539, %v540
      %v542 = vsel %vm492, %v491, -inf
      %v543 = vrot.slane %v542, 4
      %v544 = vmax.f32 %v542, %v543
      %v545 = vrot.slane %v544, 2
      %v546 = vmax.f32 %v544, %v545
      %v547 = vrot.slane %v546, 1
      %v548 = vmax.f32 %v546, %v547
      %vm557 = vcmask 1041409
      %v558 = vsel %vm557, %v506, %v499
      %vm559 = vcmask 1042434
      %v560 = vsel %vm559, %v513, %v558
      %vm561 = vcmask 1043459
      %v562 = vsel %vm561, %v520, %v560
      %vm563 = vcmask 1044484
      %v564 = vsel %vm563, %v527, %v562
      %vm565 = vcmask 1045509
      %v566 = vsel %vm565, %v534, %v564
      %vm567 = vcmask 1046534
      %v568 = vsel %vm567, %v541, %v566
      %vm569 = vcmask 1047559
      %v570 = vsel %vm569, %v548, %v568
      %572 = vxpose.xlu0.b32.start [1/16] %v570, 128
      %573 = vxpose.xlu0.b32.cont [2/16] 0.0, 128
      %574 = vxpose.xlu0.b32.cont [3/16] 0.0, 128
      %575 = vxpose.xlu0.b32.cont [4/16] 0.0, 128
      %576 = vxpose.xlu0.b32.cont [5/16] 0.0, 128
      %577 = vxpose.xlu0.b32.cont [6/16] 0.0, 128
      %578 = vxpose.xlu0.b32.cont [7/16] 0.0, 128
      %579 = vxpose.xlu0.b32.cont [8/16] 0.0, 128
      %580 = vxpose.xlu0.b32.cont [9/16] 0.0, 128
      %581 = vxpose.xlu0.b32.cont [10/16] 0.0, 128
      %582 = vxpose.xlu0.b32.cont [11/16] 0.0, 128
      %583 = vxpose.xlu0.b32.cont [12/16] 0.0, 128
      %584 = vxpose.xlu0.b32.cont [13/16] 0.0, 128
      %585 = vxpose.xlu0.b32.cont [14/16] 0.0, 128
      %586 = vxpose.xlu0.b32.cont [15/16] 0.0, 128
      %587 = vxpose.xlu0.b32.end [16/16] 0.0, 128
      %v588 = vpop.trf.xlu0
      %v589 = vpop.trf.xlu0
      %v590 = vpop.trf.xlu0
      %v591 = vpop.trf.xlu0
      %v592 = vpop.trf.xlu0
      %v593 = vpop.trf.xlu0
      %v594 = vpop.trf.xlu0
      %v595 = vpop.trf.xlu0
      %v596 = vpop.trf.xlu0
      %v597 = vpop.trf.xlu0
      %v598 = vpop.trf.xlu0
      %v599 = vpop.trf.xlu0
      %v600 = vpop.trf.xlu0
      %v601 = vpop.trf.xlu0
      %v602 = vpop.trf.xlu0
      %v603 = vpop.trf.xlu0
      %604 = vst.msk [vmem:[%s260] sm:$0xff] %vm403, %v588
      %605 = vst.msk [vmem:[%s260 + $0x8] sm:$0xff] %vm403, %v589
      %606 = vst.msk [vmem:[%s260 + $0x10] sm:$0xff] %vm403, %v590
      %607 = vst.msk [vmem:[%s260 + $0x18] sm:$0xff] %vm403, %v591
      %p608 = scmp.lt.s32.totalorder %s20, 1
      %s609 = scalar_select %p608, %s20, 1
      %p610 = scmp.lt.s32.totalorder %s21, 0
      %s611 = scalar_select %p610, %s21, 0
      %s612 = smul.addr %s609, 4
      %s613 = sadd.s32 %s611, %s612
      %s614 = smul.addr %s613, 8
      %s615 = scalar_lea.vmem %s5, %s614
      // Predicated region
      $region41: #{pointnet_sa_msg_forward.5} parent=39 // pred_check
        %p616 = pneg %p160
      $region42: #{pointnet_sa_msg_forward.5} parent=39 // pred_check_branch
        %618 = sbr.rel (%p616) target = $region44
      $region43: #{pointnet_sa_msg_forward.5} parent=39 // pred_region
        _
      $region44: #{pointnet_sa_msg_forward.5} parent=39 // pred_fallthru
        _
    $region40: #{pointnet_sa_msg_forward.5} parent=5 // pred_fallthru
      _
    %p619 = scmp.le.s32.totalorder 2, %s11
    // Predicated region
    $region45: #{pointnet_sa_msg_forward.5} parent=5 // pred_check
      %p620 = pneg %p619
    $region46: #{pointnet_sa_msg_forward.5} parent=5 // pred_check_branch
      %622 = sbr.rel (%p620) target = $region48
    $region47: #{pointnet_sa_msg_forward.5} parent=5 // pred_region
      %s623 = ssub.s32 %s11, 2
      // Predicated region
      $region49: #{pointnet_sa_msg_forward.5} parent=47 // pred_check
        %p624 = pneg %p166
      $region50: #{pointnet_sa_msg_forward.5} parent=47 // pred_check_branch
        %626 = sbr.rel (%p624) target = $region52
      $region51: #{pointnet_sa_msg_forward.5} parent=47 // pred_region
        %p627 = scmp.lt.s32.totalorder %s22, 1
        %s628 = scalar_select %p627, %s22, 1
        %p629 = scmp.lt.s32.totalorder %s23, 0
        %s630 = scalar_select %p629, %s23, 0
        %s631 = smul.addr %s628, 4
        %s632 = sadd.s32 %s630, %s631
        %s633 = smul.addr %s632, 8
        %s634 = scalar_lea.vmem %s5, %s633
      $region52: #{pointnet_sa_msg_forward.5} parent=47 // pred_fallthru
        _
    $region48: #{pointnet_sa_msg_forward.5} parent=5 // pred_fallthru
      _
  $region6: #{pointnet_sa_msg_forward.5} parent=0 // loop_footer
    %s15 = sadd.s32 1, %s11
  $region7: #{pointnet_sa_msg_forward.5} parent=0 // loop_footer_branch
    %10 = sbr.rel target = $region3
  $region8: #{pointnet_sa_msg_forward.5} parent=0 // loop_exit
    _

</llo_original>
